<compile_context>
chip_gen: v6e
topology: v6e:2x2x1
jax: 0.10.0
libtpu: 0.0.40
codegen_flags: <defaults>
</compile_context>

<pallas_src>
import functools

import jax
import jax.numpy as jnp
from jax.experimental import pallas as pl
from jax.experimental.pallas import tpu as pltpu


def _round_up(x, m):
    return ((x + m - 1) // m) * m


def _vmem_limit_bytes():
    # 64 MiB/TC on v7x vs 128 MiB on v5e/v6e -- derive instead of hardcoding.
    try:
        return int(pltpu.get_tpu_info().vmem_capacity_bytes) * 3 // 4
    except Exception:
        return 32 * 1024 * 1024


# --------------------------------------------------------------------------- #
# Kernel 1: embedding gather (DMA from HBM) + context sum                      #
# --------------------------------------------------------------------------- #
def embed_sum_kernel(ids_ref, emb_hbm, h_ref, buf, sem, *, context, tbe):
    # ids_ref : SMEM (b_pad*C,) int32  -- flat scalar-prefetched token ids
    # emb_hbm : HBM  (V, D_pad)        -- embedding table, gathered row-by-row
    # h_ref   : VMEM (TBE, D_pad)      -- context-summed embeddings (output)
    # buf     : VMEM (C, D_pad)        -- gather landing buffer
    # sem     : DMA semaphores (C,)
    i = pl.program_id(0)
    for b in range(tbe):                                    # static unroll
        base = (i * tbe + b) * context
        copies = []
        for c in range(context):
            tok = ids_ref[base + c]                         # scalar read (SMEM)
            cp = pltpu.make_async_copy(emb_hbm.at[pl.ds(tok, 1), :],
                                       buf.at[pl.ds(c, 1), :],
                                       sem.at[c])
            cp.start()
            copies.append(cp)
        for cp in copies:
            cp.wait()
        h_ref[pl.ds(b, 1), :] = jnp.sum(
            buf[...].astype(jnp.float32), axis=0, keepdims=True
        ).astype(h_ref.dtype)


# --------------------------------------------------------------------------- #
# Kernel 2: per-tile logits (h @ W_tile.T) + online log-sum-exp                #
# --------------------------------------------------------------------------- #
def logits_kernel(h_ref, w_ref, out_ref, lse_ref, m_ref, l_ref, *,
                  vocab_size, tv, num_v_tiles, mask_last):
    # h_ref   : VMEM (TB, D_pad) compute_dtype -- summed embeddings, batch tile i
    # w_ref   : VMEM (TV, D_pad) compute_dtype -- Linear weight tile j ((V, D) layout)
    # out_ref : VMEM (TB, TV) f32              -- raw logits tile (i, j)
    # lse_ref : VMEM (TB, 1)  f32              -- log-sum-exp normalizer (last j)
    # m_ref / l_ref : VMEM (TB, 1) f32         -- running max / running sum-exp
    j = pl.program_id(1)

    @pl.when(j == 0)
    def _init():
        m_ref[...] = jnp.full(m_ref.shape, -jnp.inf, jnp.float32)
        l_ref[...] = jnp.zeros(l_ref.shape, jnp.float32)

    # (TB, TV) = h @ W_tile.T ; contract on D, weight kept in PyTorch (V, D) layout.
    logits = jax.lax.dot_general(
        h_ref[...], w_ref[...],
        dimension_numbers=(((1,), (1,)), ((), ())),
        preferred_element_type=jnp.float32)

    # Lane-dense, pipelined per-tile writeback of the raw logits.
    out_ref[...] = logits

    def update_stats(stat_logits):
        m_prev = m_ref[...]
        m_new = jnp.maximum(m_prev, jnp.max(stat_logits, axis=-1, keepdims=True))
        l_ref[...] = (l_ref[...] * jnp.exp(m_prev - m_new)
                      + jnp.sum(jnp.exp(stat_logits - m_new), axis=-1,
                                keepdims=True))
        m_ref[...] = m_new

    if mask_last:
        # Only the last vocab tile can contain padded columns: keep the
        # iota / compare / select off every other grid step.
        @pl.when(j < num_v_tiles - 1)
        def _stats_inner():
            update_stats(logits)

        @pl.when(j == num_v_tiles - 1)
        def _stats_last():
            col = (num_v_tiles - 1) * tv + jax.lax.broadcasted_iota(
                jnp.int32, logits.shape, 1)
            update_stats(jnp.where(col < vocab_size, logits, -jnp.inf))
    else:
        update_stats(logits)

    @pl.when(j == num_v_tiles - 1)
    def _finalize():
        lse_ref[...] = m_ref[...] + jnp.log(l_ref[...])


# --------------------------------------------------------------------------- #
# Wrapper                                                                      #
# --------------------------------------------------------------------------- #
def cbow_forward(X, emb_table, linear_weight, *, tb=256, tv=512, tbe=8,
                 compute_dtype=jnp.bfloat16):
    """CBOW forward: log_softmax(sum_c Emb[X[:, c]] @ W.T, axis=1).

    X: (B, C) int token ids; emb_table: (V, D); linear_weight: (V, D) (PyTorch
    nn.Linear layout).  Returns (B, V) float32 log-probabilities.

    compute_dtype: bfloat16 by default (MXU throughput on v6e/v7x, half the W
    streaming traffic); pass jnp.float32 to match the PyTorch reference to
    ~1e-5.  Accumulation and all softmax math are float32 regardless.
    """
    B, C = X.shape
    V, D = emb_table.shape
    assert linear_weight.shape == (V, D)

    d_pad = _round_up(D, 128)

    # Vocab tiling: lane-dense tiles, no wider than the padded vocab.
    tv = min(_round_up(tv, 128), _round_up(V, 128))
    v_pad = _round_up(V, tv)
    nv = v_pad // tv

    # Batch tiling: large MXU-facing M, but keep >= 2 batch tiles when possible
    # so both v7x TensorCores get work.
    tb = min(_round_up(tb, 8), _round_up(B, 8))
    if _round_up(B, tb) // tb < 2 and tb > 8:
        tb = max(8, _round_up(tb // 2, 8))
    b_pad = _round_up(B, tb)
    nb = b_pad // tb

    tbe = max(8, _round_up(min(tbe, b_pad), 8))
    while b_pad % tbe:            # b_pad is a multiple of 8, so tbe=8 always works
        tbe -= 8
    nbe = b_pad // tbe

    # Clamp ids (an out-of-range id would silently gather a wrong row) and
    # flatten to 1-D for tight SMEM padding.
    ids = jnp.clip(X.astype(jnp.int32), 0, V - 1).reshape(-1)
    ids = jnp.zeros((b_pad * C,), jnp.int32).at[:B * C].set(ids)

    emb_p = jnp.zeros((V, d_pad), compute_dtype).at[:, :D].set(
        emb_table.astype(compute_dtype))
    w_p = jnp.zeros((v_pad, d_pad), compute_dtype).at[:V, :D].set(
        linear_weight.astype(compute_dtype))

    vmem_limit = _vmem_limit_bytes()

    # ---- Kernel 1: embedding gather + context sum --------------------------
    h = pl.pallas_call(
        functools.partial(embed_sum_kernel, context=C, tbe=tbe),
        out_shape=jax.ShapeDtypeStruct((b_pad, d_pad), compute_dtype),
        grid_spec=pltpu.PrefetchScalarGridSpec(
            num_scalar_prefetch=1,                         # flat token ids -> SMEM
            grid=(nbe,),
            in_specs=[pl.BlockSpec(memory_space=pl.ANY)],  # emb table stays in HBM
            out_specs=pl.BlockSpec((tbe, d_pad), lambda i, ids_ref: (i, 0)),
            scratch_shapes=[
                pltpu.VMEM((C, d_pad), compute_dtype),     # gather landing buffer
                pltpu.SemaphoreType.DMA((C,)),
            ],
        ),
        compiler_params=pltpu.CompilerParams(
            dimension_semantics=("parallel",),
            vmem_limit_bytes=vmem_limit,
        ),
    )(ids, emb_p)

    # ---- Kernel 2: logits tiles + online log-sum-exp -----------------------
    logits, lse = pl.pallas_call(
        functools.partial(logits_kernel, vocab_size=V, tv=tv, num_v_tiles=nv,
                          mask_last=(v_pad > V)),
        out_shape=(jax.ShapeDtypeStruct((b_pad, v_pad), jnp.float32),
                   jax.ShapeDtypeStruct((b_pad, 1), jnp.float32)),
        grid_spec=pltpu.PrefetchScalarGridSpec(
            num_scalar_prefetch=0,
            grid=(nb, nv),
            in_specs=[
                pl.BlockSpec((tb, d_pad), lambda i, j: (i, 0)),   # h batch tile
                # W streams one (TV, D_pad) tile per vocab step; add
                # pipeline_mode=pl.Buffered(3) here if the DMA is still exposed.
                pl.BlockSpec((tv, d_pad), lambda i, j: (j, 0)),
            ],
            out_specs=[
                pl.BlockSpec((tb, tv), lambda i, j: (i, j)),      # per-tile logits
                pl.BlockSpec((tb, 1), lambda i, j: (i, 0)),       # lse normalizer
            ],
            scratch_shapes=[
                pltpu.VMEM((tb, 1), jnp.float32),   # running max
                pltpu.VMEM((tb, 1), jnp.float32),   # running sum-exp
            ],
        ),
        compiler_params=pltpu.CompilerParams(
            dimension_semantics=("parallel", "arbitrary"),
            vmem_limit_bytes=vmem_limit,
        ),
    )(h, w_p)

    # Trivial fused elementwise epilogue: subtract the log-softmax normalizer.
    return logits[:B, :V] - lse[:B]


def cbow_reference(X, emb_table, linear_weight):
    h = jnp.sum(emb_table[X], axis=1)                    # (B, D)
    logits = h @ linear_weight.T                         # (B, V)
    return jax.nn.log_softmax(logits, axis=1)


if __name__ == "__main__":
    vocab_size = 320       # not a multiple of 128 -> exercises padded-column masking
    dimension_size = 32
    batch = 24
    context = 4

    key = jax.random.PRNGKey(0)
    k_emb, k_lin, k_idx = jax.random.split(key, 3)

    emb_table = jax.random.normal(k_emb, (vocab_size, dimension_size),
                                  dtype=jnp.float32)
    linear_weight = (jax.random.normal(k_lin, (vocab_size, dimension_size),
                                       dtype=jnp.float32) * 0.1)
    X = jax.random.randint(k_idx, (batch, context), 0, vocab_size,
                           dtype=jnp.int32)

    ref = cbow_reference(X, emb_table, linear_weight)

    # f32 run with small tiles: exercises multi-batch-tile, multi-vocab-tile and
    # masked-last-tile paths; tight tolerance vs the reference.
    out32 = jax.block_until_ready(
        cbow_forward(X, emb_table, linear_weight, tb=8, tv=128,
                     compute_dtype=jnp.float32))
    assert out32.shape == (batch, vocab_size)
    assert jnp.allclose(out32, ref, atol=1e-4, rtol=1e-4), "f32 mismatch vs reference"

    # Default (bf16, large-tile, MXU-friendly) configuration; looser tolerance.
    out16 = jax.block_until_ready(cbow_forward(X, emb_table, linear_weight))
    assert out16.shape == (batch, vocab_size)
    assert jnp.allclose(out16, ref, atol=5e-2, rtol=5e-2), "bf16 mismatch vs reference"

    print("KERNEL_OK")
</pallas_src>

<mosaic_0001>
module attributes {stable_mosaic.version = 11 : i64} {
  func.func @embed_sum_kernel(%arg0: i32, %arg1: memref<96xi32, #tpu.memory_space<smem>>, %arg2: memref<320x128xf32, #tpu.memory_space<any>>, %arg3: memref<8x128xf32, #tpu.memory_space<vmem>>, %arg4: memref<4x128xf32, #tpu.memory_space<vmem>>, %arg5: memref<4x!tpu.dma_semaphore, #tpu.memory_space<semaphore_mem>>) attributes {dimension_semantics = [#tpu.dimension_semantics<parallel>], iteration_bounds = array<i64: 3>, scalar_prefetch = 1 : i64, scratch_operands = 2 : i64, tpu.core_type = #tpu.core_type<tc>, window_params = [{}, {transform_indices = @transform_1, window_bounds = array<i64: 8, 128>}]} {
    %c8_i32 = arith.constant 8 : i32
    %0 = arith.muli %arg0, %c8_i32 : i32
    %c0_i32 = arith.constant 0 : i32
    %1 = arith.addi %0, %c0_i32 : i32
    %c4_i32 = arith.constant 4 : i32
    %2 = arith.muli %1, %c4_i32 : i32
    %c0_i32_0 = arith.constant 0 : i32
    %3 = arith.addi %2, %c0_i32_0 : i32
    %4 = arith.index_cast %3 : i32 to index
    %5 = memref.load %arg1[%4] : memref<96xi32, #tpu.memory_space<smem>>
    %c0_i32_1 = arith.constant 0 : i32
    %c0_i32_2 = arith.constant 0 : i32
    %6 = tpu.memref_slice %arg2[%5, %c0_i32_2] : memref<320x128xf32, #tpu.memory_space<any>> -> memref<1x128xf32, #tpu.memory_space<any>>
    %c0_i32_3 = arith.constant 0 : i32
    %c0_i32_4 = arith.constant 0 : i32
    %7 = tpu.memref_slice %arg4[%c0_i32_3, %c0_i32_4] : memref<4x128xf32, #tpu.memory_space<vmem>> -> memref<1x128xf32, #tpu.memory_space<vmem>>
    %8 = tpu.memref_slice %arg5[%c0_i32_1] : memref<4x!tpu.dma_semaphore, #tpu.memory_space<semaphore_mem>> -> memref<1x!tpu.dma_semaphore, #tpu.memory_space<semaphore_mem>>
    %9 = tpu.memref_squeeze %8 : memref<1x!tpu.dma_semaphore, #tpu.memory_space<semaphore_mem>> -> memref<!tpu.dma_semaphore, #tpu.memory_space<semaphore_mem>>
    tpu.enqueue_dma source(%6 : memref<1x128xf32, #tpu.memory_space<any>>) target(%7 : memref<1x128xf32, #tpu.memory_space<vmem>>) target_semaphore(%9 : memref<!tpu.dma_semaphore, #tpu.memory_space<semaphore_mem>>)
    %c1_i32 = arith.constant 1 : i32
    %10 = arith.addi %2, %c1_i32 : i32
    %11 = arith.index_cast %10 : i32 to index
    %12 = memref.load %arg1[%11] : memref<96xi32, #tpu.memory_space<smem>>
    %c1_i32_5 = arith.constant 1 : i32
    %c0_i32_6 = arith.constant 0 : i32
    %13 = tpu.memref_slice %arg2[%12, %c0_i32_6] : memref<320x128xf32, #tpu.memory_space<any>> -> memref<1x128xf32, #tpu.memory_space<any>>
    %c1_i32_7 = arith.constant 1 : i32
    %c0_i32_8 = arith.constant 0 : i32
    %14 = tpu.memref_slice %arg4[%c1_i32_7, %c0_i32_8] : memref<4x128xf32, #tpu.memory_space<vmem>> -> memref<1x128xf32, #tpu.memory_space<vmem>>
    %15 = tpu.memref_slice %arg5[%c1_i32_5] : memref<4x!tpu.dma_semaphore, #tpu.memory_space<semaphore_mem>> -> memref<1x!tpu.dma_semaphore, #tpu.memory_space<semaphore_mem>>
    %16 = tpu.memref_squeeze %15 : memref<1x!tpu.dma_semaphore, #tpu.memory_space<semaphore_mem>> -> memref<!tpu.dma_semaphore, #tpu.memory_space<semaphore_mem>>
    tpu.enqueue_dma source(%13 : memref<1x128xf32, #tpu.memory_space<any>>) target(%14 : memref<1x128xf32, #tpu.memory_space<vmem>>) target_semaphore(%16 : memref<!tpu.dma_semaphore, #tpu.memory_space<semaphore_mem>>)
    %c2_i32 = arith.constant 2 : i32
    %17 = arith.addi %2, %c2_i32 : i32
    %18 = arith.index_cast %17 : i32 to index
    %19 = memref.load %arg1[%18] : memref<96xi32, #tpu.memory_space<smem>>
    %c2_i32_9 = arith.constant 2 : i32
    %c0_i32_10 = arith.constant 0 : i32
    %20 = tpu.memref_slice %arg2[%19, %c0_i32_10] : memref<320x128xf32, #tpu.memory_space<any>> -> memref<1x128xf32, #tpu.memory_space<any>>
    %c2_i32_11 = arith.constant 2 : i32
    %c0_i32_12 = arith.constant 0 : i32
    %21 = tpu.memref_slice %arg4[%c2_i32_11, %c0_i32_12] : memref<4x128xf32, #tpu.memory_space<vmem>> -> memref<1x128xf32, #tpu.memory_space<vmem>>
    %22 = tpu.memref_slice %arg5[%c2_i32_9] : memref<4x!tpu.dma_semaphore, #tpu.memory_space<semaphore_mem>> -> memref<1x!tpu.dma_semaphore, #tpu.memory_space<semaphore_mem>>
    %23 = tpu.memref_squeeze %22 : memref<1x!tpu.dma_semaphore, #tpu.memory_space<semaphore_mem>> -> memref<!tpu.dma_semaphore, #tpu.memory_space<semaphore_mem>>
    tpu.enqueue_dma source(%20 : memref<1x128xf32, #tpu.memory_space<any>>) target(%21 : memref<1x128xf32, #tpu.memory_space<vmem>>) target_semaphore(%23 : memref<!tpu.dma_semaphore, #tpu.memory_space<semaphore_mem>>)
    %c3_i32 = arith.constant 3 : i32
    %24 = arith.addi %2, %c3_i32 : i32
    %25 = arith.index_cast %24 : i32 to index
    %26 = memref.load %arg1[%25] : memref<96xi32, #tpu.memory_space<smem>>
    %c3_i32_13 = arith.constant 3 : i32
    %c0_i32_14 = arith.constant 0 : i32
    %27 = tpu.memref_slice %arg2[%26, %c0_i32_14] : memref<320x128xf32, #tpu.memory_space<any>> -> memref<1x128xf32, #tpu.memory_space<any>>
    %c3_i32_15 = arith.constant 3 : i32
    %c0_i32_16 = arith.constant 0 : i32
    %28 = tpu.memref_slice %arg4[%c3_i32_15, %c0_i32_16] : memref<4x128xf32, #tpu.memory_space<vmem>> -> memref<1x128xf32, #tpu.memory_space<vmem>>
    %29 = tpu.memref_slice %arg5[%c3_i32_13] : memref<4x!tpu.dma_semaphore, #tpu.memory_space<semaphore_mem>> -> memref<1x!tpu.dma_semaphore, #tpu.memory_space<semaphore_mem>>
    %30 = tpu.memref_squeeze %29 : memref<1x!tpu.dma_semaphore, #tpu.memory_space<semaphore_mem>> -> memref<!tpu.dma_semaphore, #tpu.memory_space<semaphore_mem>>
    tpu.enqueue_dma source(%27 : memref<1x128xf32, #tpu.memory_space<any>>) target(%28 : memref<1x128xf32, #tpu.memory_space<vmem>>) target_semaphore(%30 : memref<!tpu.dma_semaphore, #tpu.memory_space<semaphore_mem>>)
    %c0_i32_17 = arith.constant 0 : i32
    %c0_i32_18 = arith.constant 0 : i32
    %31 = tpu.memref_slice %arg2[%5, %c0_i32_18] : memref<320x128xf32, #tpu.memory_space<any>> -> memref<1x128xf32, #tpu.memory_space<any>>
    %c0_i32_19 = arith.constant 0 : i32
    %c0_i32_20 = arith.constant 0 : i32
    %32 = tpu.memref_slice %arg4[%c0_i32_19, %c0_i32_20] : memref<4x128xf32, #tpu.memory_space<vmem>> -> memref<1x128xf32, #tpu.memory_space<vmem>>
    %33 = tpu.memref_slice %arg5[%c0_i32_17] : memref<4x!tpu.dma_semaphore, #tpu.memory_space<semaphore_mem>> -> memref<1x!tpu.dma_semaphore, #tpu.memory_space<semaphore_mem>>
    %34 = tpu.memref_squeeze %33 : memref<1x!tpu.dma_semaphore, #tpu.memory_space<semaphore_mem>> -> memref<!tpu.dma_semaphore, #tpu.memory_space<semaphore_mem>>
    tpu.wait_dma2 semaphore(%34 : memref<!tpu.dma_semaphore, #tpu.memory_space<semaphore_mem>>) src(%31 : memref<1x128xf32, #tpu.memory_space<any>>) dst(%32 : memref<1x128xf32, #tpu.memory_space<vmem>>)
    %c1_i32_21 = arith.constant 1 : i32
    %c0_i32_22 = arith.constant 0 : i32
    %35 = tpu.memref_slice %arg2[%12, %c0_i32_22] : memref<320x128xf32, #tpu.memory_space<any>> -> memref<1x128xf32, #tpu.memory_space<any>>
    %c1_i32_23 = arith.constant 1 : i32
    %c0_i32_24 = arith.constant 0 : i32
    %36 = tpu.memref_slice %arg4[%c1_i32_23, %c0_i32_24] : memref<4x128xf32, #tpu.memory_space<vmem>> -> memref<1x128xf32, #tpu.memory_space<vmem>>
    %37 = tpu.memref_slice %arg5[%c1_i32_21] : memref<4x!tpu.dma_semaphore, #tpu.memory_space<semaphore_mem>> -> memref<1x!tpu.dma_semaphore, #tpu.memory_space<semaphore_mem>>
    %38 = tpu.memref_squeeze %37 : memref<1x!tpu.dma_semaphore, #tpu.memory_space<semaphore_mem>> -> memref<!tpu.dma_semaphore, #tpu.memory_space<semaphore_mem>>
    tpu.wait_dma2 semaphore(%38 : memref<!tpu.dma_semaphore, #tpu.memory_space<semaphore_mem>>) src(%35 : memref<1x128xf32, #tpu.memory_space<any>>) dst(%36 : memref<1x128xf32, #tpu.memory_space<vmem>>)
    %c2_i32_25 = arith.constant 2 : i32
    %c0_i32_26 = arith.constant 0 : i32
    %39 = tpu.memref_slice %arg2[%19, %c0_i32_26] : memref<320x128xf32, #tpu.memory_space<any>> -> memref<1x128xf32, #tpu.memory_space<any>>
    %c2_i32_27 = arith.constant 2 : i32
    %c0_i32_28 = arith.constant 0 : i32
    %40 = tpu.memref_slice %arg4[%c2_i32_27, %c0_i32_28] : memref<4x128xf32, #tpu.memory_space<vmem>> -> memref<1x128xf32, #tpu.memory_space<vmem>>
    %41 = tpu.memref_slice %arg5[%c2_i32_25] : memref<4x!tpu.dma_semaphore, #tpu.memory_space<semaphore_mem>> -> memref<1x!tpu.dma_semaphore, #tpu.memory_space<semaphore_mem>>
    %42 = tpu.memref_squeeze %41 : memref<1x!tpu.dma_semaphore, #tpu.memory_space<semaphore_mem>> -> memref<!tpu.dma_semaphore, #tpu.memory_space<semaphore_mem>>
    tpu.wait_dma2 semaphore(%42 : memref<!tpu.dma_semaphore, #tpu.memory_space<semaphore_mem>>) src(%39 : memref<1x128xf32, #tpu.memory_space<any>>) dst(%40 : memref<1x128xf32, #tpu.memory_space<vmem>>)
    %c3_i32_29 = arith.constant 3 : i32
    %c0_i32_30 = arith.constant 0 : i32
    %43 = tpu.memref_slice %arg2[%26, %c0_i32_30] : memref<320x128xf32, #tpu.memory_space<any>> -> memref<1x128xf32, #tpu.memory_space<any>>
    %c3_i32_31 = arith.constant 3 : i32
    %c0_i32_32 = arith.constant 0 : i32
    %44 = tpu.memref_slice %arg4[%c3_i32_31, %c0_i32_32] : memref<4x128xf32, #tpu.memory_space<vmem>> -> memref<1x128xf32, #tpu.memory_space<vmem>>
    %45 = tpu.memref_slice %arg5[%c3_i32_29] : memref<4x!tpu.dma_semaphore, #tpu.memory_space<semaphore_mem>> -> memref<1x!tpu.dma_semaphore, #tpu.memory_space<semaphore_mem>>
    %46 = tpu.memref_squeeze %45 : memref<1x!tpu.dma_semaphore, #tpu.memory_space<semaphore_mem>> -> memref<!tpu.dma_semaphore, #tpu.memory_space<semaphore_mem>>
    tpu.wait_dma2 semaphore(%46 : memref<!tpu.dma_semaphore, #tpu.memory_space<semaphore_mem>>) src(%43 : memref<1x128xf32, #tpu.memory_space<any>>) dst(%44 : memref<1x128xf32, #tpu.memory_space<vmem>>)
    %c0 = arith.constant 0 : index
    %c0_33 = arith.constant 0 : index
    %47 = vector.load %arg4[%c0, %c0_33] : memref<4x128xf32, #tpu.memory_space<vmem>>, vector<4x128xf32>
    %cst = arith.constant dense<0.000000e+00> : vector<128xf32>
    %48 = vector.multi_reduction <add>, %47, %cst [0] : vector<4x128xf32> to vector<128xf32>
    %49 = vector.shape_cast %48 : vector<128xf32> to vector<1x128xf32>
    %c0_34 = arith.constant 0 : index
    %c0_35 = arith.constant 0 : index
    %50 = vector.load %arg3[%c0_34, %c0_35] : memref<8x128xf32, #tpu.memory_space<vmem>>, vector<1x128xf32>
    tpu.vector_store %arg3[%c0_34, %c0_35], %49 {strides = array<i32>} : memref<8x128xf32, #tpu.memory_space<vmem>>, vector<1x128xf32>,
    %c8_i32_36 = arith.constant 8 : i32
    %51 = arith.muli %arg0, %c8_i32_36 : i32
    %c1_i32_37 = arith.constant 1 : i32
    %52 = arith.addi %51, %c1_i32_37 : i32
    %c4_i32_38 = arith.constant 4 : i32
    %53 = arith.muli %52, %c4_i32_38 : i32
    %c0_i32_39 = arith.constant 0 : i32
    %54 = arith.addi %53, %c0_i32_39 : i32
    %55 = arith.index_cast %54 : i32 to index
    %56 = memref.load %arg1[%55] : memref<96xi32, #tpu.memory_space<smem>>
    %c0_i32_40 = arith.constant 0 : i32
    %c0_i32_41 = arith.constant 0 : i32
    %57 = tpu.memref_slice %arg2[%56, %c0_i32_41] : memref<320x128xf32, #tpu.memory_space<any>> -> memref<1x128xf32, #tpu.memory_space<any>>
    %c0_i32_42 = arith.constant 0 : i32
    %c0_i32_43 = arith.constant 0 : i32
    %58 = tpu.memref_slice %arg4[%c0_i32_42, %c0_i32_43] : memref<4x128xf32, #tpu.memory_space<vmem>> -> memref<1x128xf32, #tpu.memory_space<vmem>>
    %59 = tpu.memref_slice %arg5[%c0_i32_40] : memref<4x!tpu.dma_semaphore, #tpu.memory_space<semaphore_mem>> -> memref<1x!tpu.dma_semaphore, #tpu.memory_space<semaphore_mem>>
    %60 = tpu.memref_squeeze %59 : memref<1x!tpu.dma_semaphore, #tpu.memory_space<semaphore_mem>> -> memref<!tpu.dma_semaphore, #tpu.memory_space<semaphore_mem>>
    tpu.enqueue_dma source(%57 : memref<1x128xf32, #tpu.memory_space<any>>) target(%58 : memref<1x128xf32, #tpu.memory_space<vmem>>) target_semaphore(%60 : memref<!tpu.dma_semaphore, #tpu.memory_space<semaphore_mem>>)
    %c1_i32_44 = arith.constant 1 : i32
    %61 = arith.addi %53, %c1_i32_44 : i32
    %62 = arith.index_cast %61 : i32 to index
    %63 = memref.load %arg1[%62] : memref<96xi32, #tpu.memory_space<smem>>
    %c1_i32_45 = arith.constant 1 : i32
    %c0_i32_46 = arith.constant 0 : i32
    %64 = tpu.memref_slice %arg2[%63, %c0_i32_46] : memref<320x128xf32, #tpu.memory_space<any>> -> memref<1x128xf32, #tpu.memory_space<any>>
    %c1_i32_47 = arith.constant 1 : i32
    %c0_i32_48 = arith.constant 0 : i32
    %65 = tpu.memref_slice %arg4[%c1_i32_47, %c0_i32_48] : memref<4x128xf32, #tpu.memory_space<vmem>> -> memref<1x128xf32, #tpu.memory_space<vmem>>
    %66 = tpu.memref_slice %arg5[%c1_i32_45] : memref<4x!tpu.dma_semaphore, #tpu.memory_space<semaphore_mem>> -> memref<1x!tpu.dma_semaphore, #tpu.memory_space<semaphore_mem>>
    %67 = tpu.memref_squeeze %66 : memref<1x!tpu.dma_semaphore, #tpu.memory_space<semaphore_mem>> -> memref<!tpu.dma_semaphore, #tpu.memory_space<semaphore_mem>>
    tpu.enqueue_dma source(%64 : memref<1x128xf32, #tpu.memory_space<any>>) target(%65 : memref<1x128xf32, #tpu.memory_space<vmem>>) target_semaphore(%67 : memref<!tpu.dma_semaphore, #tpu.memory_space<semaphore_mem>>)
    %c2_i32_49 = arith.constant 2 : i32
    %68 = arith.addi %53, %c2_i32_49 : i32
    %69 = arith.index_cast %68 : i32 to index
    %70 = memref.load %arg1[%69] : memref<96xi32, #tpu.memory_space<smem>>
    %c2_i32_50 = arith.constant 2 : i32
    %c0_i32_51 = arith.constant 0 : i32
    %71 = tpu.memref_slice %arg2[%70, %c0_i32_51] : memref<320x128xf32, #tpu.memory_space<any>> -> memref<1x128xf32, #tpu.memory_space<any>>
    %c2_i32_52 = arith.constant 2 : i32
    %c0_i32_53 = arith.constant 0 : i32
    %72 = tpu.memref_slice %arg4[%c2_i32_52, %c0_i32_53] : memref<4x128xf32, #tpu.memory_space<vmem>> -> memref<1x128xf32, #tpu.memory_space<vmem>>
    %73 = tpu.memref_slice %arg5[%c2_i32_50] : memref<4x!tpu.dma_semaphore, #tpu.memory_space<semaphore_mem>> -> memref<1x!tpu.dma_semaphore, #tpu.memory_space<semaphore_mem>>
    %74 = tpu.memref_squeeze %73 : memref<1x!tpu.dma_semaphore, #tpu.memory_space<semaphore_mem>> -> memref<!tpu.dma_semaphore, #tpu.memory_space<semaphore_mem>>
    tpu.enqueue_dma source(%71 : memref<1x128xf32, #tpu.memory_space<any>>) target(%72 : memref<1x128xf32, #tpu.memory_space<vmem>>) target_semaphore(%74 : memref<!tpu.dma_semaphore, #tpu.memory_space<semaphore_mem>>)
    %c3_i32_54 = arith.constant 3 : i32
    %75 = arith.addi %53, %c3_i32_54 : i32
    %76 = arith.index_cast %75 : i32 to index
    %77 = memref.load %arg1[%76] : memref<96xi32, #tpu.memory_space<smem>>
    %c3_i32_55 = arith.constant 3 : i32
    %c0_i32_56 = arith.constant 0 : i32
    %78 = tpu.memref_slice %arg2[%77, %c0_i32_56] : memref<320x128xf32, #tpu.memory_space<any>> -> memref<1x128xf32, #tpu.memory_space<any>>
    %c3_i32_57 = arith.constant 3 : i32
    %c0_i32_58 = arith.constant 0 : i32
    %79 = tpu.memref_slice %arg4[%c3_i32_57, %c0_i32_58] : memref<4x128xf32, #tpu.memory_space<vmem>> -> memref<1x128xf32, #tpu.memory_space<vmem>>
    %80 = tpu.memref_slice %arg5[%c3_i32_55] : memref<4x!tpu.dma_semaphore, #tpu.memory_space<semaphore_mem>> -> memref<1x!tpu.dma_semaphore, #tpu.memory_space<semaphore_mem>>
    %81 = tpu.memref_squeeze %80 : memref<1x!tpu.dma_semaphore, #tpu.memory_space<semaphore_mem>> -> memref<!tpu.dma_semaphore, #tpu.memory_space<semaphore_mem>>
    tpu.enqueue_dma source(%78 : memref<1x128xf32, #tpu.memory_space<any>>) target(%79 : memref<1x128xf32, #tpu.memory_space<vmem>>) target_semaphore(%81 : memref<!tpu.dma_semaphore, #tpu.memory_space<semaphore_mem>>)
    %c0_i32_59 = arith.constant 0 : i32
    %c0_i32_60 = arith.constant 0 : i32
    %82 = tpu.memref_slice %arg2[%56, %c0_i32_60] : memref<320x128xf32, #tpu.memory_space<any>> -> memref<1x128xf32, #tpu.memory_space<any>>
    %c0_i32_61 = arith.constant 0 : i32
    %c0_i32_62 = arith.constant 0 : i32
    %83 = tpu.memref_slice %arg4[%c0_i32_61, %c0_i32_62] : memref<4x128xf32, #tpu.memory_space<vmem>> -> memref<1x128xf32, #tpu.memory_space<vmem>>
    %84 = tpu.memref_slice %arg5[%c0_i32_59] : memref<4x!tpu.dma_semaphore, #tpu.memory_space<semaphore_mem>> -> memref<1x!tpu.dma_semaphore, #tpu.memory_space<semaphore_mem>>
    %85 = tpu.memref_squeeze %84 : memref<1x!tpu.dma_semaphore, #tpu.memory_space<semaphore_mem>> -> memref<!tpu.dma_semaphore, #tpu.memory_space<semaphore_mem>>
    tpu.wait_dma2 semaphore(%85 : memref<!tpu.dma_semaphore, #tpu.memory_space<semaphore_mem>>) src(%82 : memref<1x128xf32, #tpu.memory_space<any>>) dst(%83 : memref<1x128xf32, #tpu.memory_space<vmem>>)
    %c1_i32_63 = arith.constant 1 : i32
    %c0_i32_64 = arith.constant 0 : i32
    %86 = tpu.memref_slice %arg2[%63, %c0_i32_64] : memref<320x128xf32, #tpu.memory_space<any>> -> memref<1x128xf32, #tpu.memory_space<any>>
    %c1_i32_65 = arith.constant 1 : i32
    %c0_i32_66 = arith.constant 0 : i32
    %87 = tpu.memref_slice %arg4[%c1_i32_65, %c0_i32_66] : memref<4x128xf32, #tpu.memory_space<vmem>> -> memref<1x128xf32, #tpu.memory_space<vmem>>
    %88 = tpu.memref_slice %arg5[%c1_i32_63] : memref<4x!tpu.dma_semaphore, #tpu.memory_space<semaphore_mem>> -> memref<1x!tpu.dma_semaphore, #tpu.memory_space<semaphore_mem>>
    %89 = tpu.memref_squeeze %88 : memref<1x!tpu.dma_semaphore, #tpu.memory_space<semaphore_mem>> -> memref<!tpu.dma_semaphore, #tpu.memory_space<semaphore_mem>>
    tpu.wait_dma2 semaphore(%89 : memref<!tpu.dma_semaphore, #tpu.memory_space<semaphore_mem>>) src(%86 : memref<1x128xf32, #tpu.memory_space<any>>) dst(%87 : memref<1x128xf32, #tpu.memory_space<vmem>>)
    %c2_i32_67 = arith.constant 2 : i32
    %c0_i32_68 = arith.constant 0 : i32
    %90 = tpu.memref_slice %arg2[%70, %c0_i32_68] : memref<320x128xf32, #tpu.memory_space<any>> -> memref<1x128xf32, #tpu.memory_space<any>>
    %c2_i32_69 = arith.constant 2 : i32
    %c0_i32_70 = arith.constant 0 : i32
    %91 = tpu.memref_slice %arg4[%c2_i32_69, %c0_i32_70] : memref<4x128xf32, #tpu.memory_space<vmem>> -> memref<1x128xf32, #tpu.memory_space<vmem>>
    %92 = tpu.memref_slice %arg5[%c2_i32_67] : memref<4x!tpu.dma_semaphore, #tpu.memory_space<semaphore_mem>> -> memref<1x!tpu.dma_semaphore, #tpu.memory_space<semaphore_mem>>
    %93 = tpu.memref_squeeze %92 : memref<1x!tpu.dma_semaphore, #tpu.memory_space<semaphore_mem>> -> memref<!tpu.dma_semaphore, #tpu.memory_space<semaphore_mem>>
    tpu.wait_dma2 semaphore(%93 : memref<!tpu.dma_semaphore, #tpu.memory_space<semaphore_mem>>) src(%90 : memref<1x128xf32, #tpu.memory_space<any>>) dst(%91 : memref<1x128xf32, #tpu.memory_space<vmem>>)
    %c3_i32_71 = arith.constant 3 : i32
    %c0_i32_72 = arith.constant 0 : i32
    %94 = tpu.memref_slice %arg2[%77, %c0_i32_72] : memref<320x128xf32, #tpu.memory_space<any>> -> memref<1x128xf32, #tpu.memory_space<any>>
    %c3_i32_73 = arith.constant 3 : i32
    %c0_i32_74 = arith.constant 0 : i32
    %95 = tpu.memref_slice %arg4[%c3_i32_73, %c0_i32_74] : memref<4x128xf32, #tpu.memory_space<vmem>> -> memref<1x128xf32, #tpu.memory_space<vmem>>
    %96 = tpu.memref_slice %arg5[%c3_i32_71] : memref<4x!tpu.dma_semaphore, #tpu.memory_space<semaphore_mem>> -> memref<1x!tpu.dma_semaphore, #tpu.memory_space<semaphore_mem>>
    %97 = tpu.memref_squeeze %96 : memref<1x!tpu.dma_semaphore, #tpu.memory_space<semaphore_mem>> -> memref<!tpu.dma_semaphore, #tpu.memory_space<semaphore_mem>>
    tpu.wait_dma2 semaphore(%97 : memref<!tpu.dma_semaphore, #tpu.memory_space<semaphore_mem>>) src(%94 : memref<1x128xf32, #tpu.memory_space<any>>) dst(%95 : memref<1x128xf32, #tpu.memory_space<vmem>>)
    %c0_75 = arith.constant 0 : index
    %c0_76 = arith.constant 0 : index
    %98 = vector.load %arg4[%c0_75, %c0_76] : memref<4x128xf32, #tpu.memory_space<vmem>>, vector<4x128xf32>
    %cst_77 = arith.constant dense<0.000000e+00> : vector<128xf32>
    %99 = vector.multi_reduction <add>, %98, %cst_77 [0] : vector<4x128xf32> to vector<128xf32>
    %100 = vector.shape_cast %99 : vector<128xf32> to vector<1x128xf32>
    %c1 = arith.constant 1 : index
    %c0_78 = arith.constant 0 : index
    %101 = vector.load %arg3[%c1, %c0_78] : memref<8x128xf32, #tpu.memory_space<vmem>>, vector<1x128xf32>
    tpu.vector_store %arg3[%c1, %c0_78], %100 {strides = array<i32>} : memref<8x128xf32, #tpu.memory_space<vmem>>, vector<1x128xf32>,
    %c8_i32_79 = arith.constant 8 : i32
    %102 = arith.muli %arg0, %c8_i32_79 : i32
    %c2_i32_80 = arith.constant 2 : i32
    %103 = arith.addi %102, %c2_i32_80 : i32
    %c4_i32_81 = arith.constant 4 : i32
    %104 = arith.muli %103, %c4_i32_81 : i32
    %c0_i32_82 = arith.constant 0 : i32
    %105 = arith.addi %104, %c0_i32_82 : i32
    %106 = arith.index_cast %105 : i32 to index
    %107 = memref.load %arg1[%106] : memref<96xi32, #tpu.memory_space<smem>>
    %c0_i32_83 = arith.constant 0 : i32
    %c0_i32_84 = arith.constant 0 : i32
    %108 = tpu.memref_slice %arg2[%107, %c0_i32_84] : memref<320x128xf32, #tpu.memory_space<any>> -> memref<1x128xf32, #tpu.memory_space<any>>
    %c0_i32_85 = arith.constant 0 : i32
    %c0_i32_86 = arith.constant 0 : i32
    %109 = tpu.memref_slice %arg4[%c0_i32_85, %c0_i32_86] : memref<4x128xf32, #tpu.memory_space<vmem>> -> memref<1x128xf32, #tpu.memory_space<vmem>>
    %110 = tpu.memref_slice %arg5[%c0_i32_83] : memref<4x!tpu.dma_semaphore, #tpu.memory_space<semaphore_mem>> -> memref<1x!tpu.dma_semaphore, #tpu.memory_space<semaphore_mem>>
    %111 = tpu.memref_squeeze %110 : memref<1x!tpu.dma_semaphore, #tpu.memory_space<semaphore_mem>> -> memref<!tpu.dma_semaphore, #tpu.memory_space<semaphore_mem>>
    tpu.enqueue_dma source(%108 : memref<1x128xf32, #tpu.memory_space<any>>) target(%109 : memref<1x128xf32, #tpu.memory_space<vmem>>) target_semaphore(%111 : memref<!tpu.dma_semaphore, #tpu.memory_space<semaphore_mem>>)
    %c1_i32_87 = arith.constant 1 : i32
    %112 = arith.addi %104, %c1_i32_87 : i32
    %113 = arith.index_cast %112 : i32 to index
    %114 = memref.load %arg1[%113] : memref<96xi32, #tpu.memory_space<smem>>
    %c1_i32_88 = arith.constant 1 : i32
    %c0_i32_89 = arith.constant 0 : i32
    %115 = tpu.memref_slice %arg2[%114, %c0_i32_89] : memref<320x128xf32, #tpu.memory_space<any>> -> memref<1x128xf32, #tpu.memory_space<any>>
    %c1_i32_90 = arith.constant 1 : i32
    %c0_i32_91 = arith.constant 0 : i32
    %116 = tpu.memref_slice %arg4[%c1_i32_90, %c0_i32_91] : memref<4x128xf32, #tpu.memory_space<vmem>> -> memref<1x128xf32, #tpu.memory_space<vmem>>
    %117 = tpu.memref_slice %arg5[%c1_i32_88] : memref<4x!tpu.dma_semaphore, #tpu.memory_space<semaphore_mem>> -> memref<1x!tpu.dma_semaphore, #tpu.memory_space<semaphore_mem>>
    %118 = tpu.memref_squeeze %117 : memref<1x!tpu.dma_semaphore, #tpu.memory_space<semaphore_mem>> -> memref<!tpu.dma_semaphore, #tpu.memory_space<semaphore_mem>>
    tpu.enqueue_dma source(%115 : memref<1x128xf32, #tpu.memory_space<any>>) target(%116 : memref<1x128xf32, #tpu.memory_space<vmem>>) target_semaphore(%118 : memref<!tpu.dma_semaphore, #tpu.memory_space<semaphore_mem>>)
    %c2_i32_92 = arith.constant 2 : i32
    %119 = arith.addi %104, %c2_i32_92 : i32
    %120 = arith.index_cast %119 : i32 to index
    %121 = memref.load %arg1[%120] : memref<96xi32, #tpu.memory_space<smem>>
    %c2_i32_93 = arith.constant 2 : i32
    %c0_i32_94 = arith.constant 0 : i32
    %122 = tpu.memref_slice %arg2[%121, %c0_i32_94] : memref<320x128xf32, #tpu.memory_space<any>> -> memref<1x128xf32, #tpu.memory_space<any>>
    %c2_i32_95 = arith.constant 2 : i32
    %c0_i32_96 = arith.constant 0 : i32
    %123 = tpu.memref_slice %arg4[%c2_i32_95, %c0_i32_96] : memref<4x128xf32, #tpu.memory_space<vmem>> -> memref<1x128xf32, #tpu.memory_space<vmem>>
    %124 = tpu.memref_slice %arg5[%c2_i32_93] : memref<4x!tpu.dma_semaphore, #tpu.memory_space<semaphore_mem>> -> memref<1x!tpu.dma_semaphore, #tpu.memory_space<semaphore_mem>>
    %125 = tpu.memref_squeeze %124 : memref<1x!tpu.dma_semaphore, #tpu.memory_space<semaphore_mem>> -> memref<!tpu.dma_semaphore, #tpu.memory_space<semaphore_mem>>
    tpu.enqueue_dma source(%122 : memref<1x128xf32, #tpu.memory_space<any>>) target(%123 : memref<1x128xf32, #tpu.memory_space<vmem>>) target_semaphore(%125 : memref<!tpu.dma_semaphore, #tpu.memory_space<semaphore_mem>>)
    %c3_i32_97 = arith.constant 3 : i32
    %126 = arith.addi %104, %c3_i32_97 : i32
    %127 = arith.index_cast %126 : i32 to index
    %128 = memref.load %arg1[%127] : memref<96xi32, #tpu.memory_space<smem>>
    %c3_i32_98 = arith.constant 3 : i32
    %c0_i32_99 = arith.constant 0 : i32
    %129 = tpu.memref_slice %arg2[%128, %c0_i32_99] : memref<320x128xf32, #tpu.memory_space<any>> -> memref<1x128xf32, #tpu.memory_space<any>>
    %c3_i32_100 = arith.constant 3 : i32
    %c0_i32_101 = arith.constant 0 : i32
    %130 = tpu.memref_slice %arg4[%c3_i32_100, %c0_i32_101] : memref<4x128xf32, #tpu.memory_space<vmem>> -> memref<1x128xf32, #tpu.memory_space<vmem>>
    %131 = tpu.memref_slice %arg5[%c3_i32_98] : memref<4x!tpu.dma_semaphore, #tpu.memory_space<semaphore_mem>> -> memref<1x!tpu.dma_semaphore, #tpu.memory_space<semaphore_mem>>
    %132 = tpu.memref_squeeze %131 : memref<1x!tpu.dma_semaphore, #tpu.memory_space<semaphore_mem>> -> memref<!tpu.dma_semaphore, #tpu.memory_space<semaphore_mem>>
    tpu.enqueue_dma source(%129 : memref<1x128xf32, #tpu.memory_space<any>>) target(%130 : memref<1x128xf32, #tpu.memory_space<vmem>>) target_semaphore(%132 : memref<!tpu.dma_semaphore, #tpu.memory_space<semaphore_mem>>)
    %c0_i32_102 = arith.constant 0 : i32
    %c0_i32_103 = arith.constant 0 : i32
    %133 = tpu.memref_slice %arg2[%107, %c0_i32_103] : memref<320x128xf32, #tpu.memory_space<any>> -> memref<1x128xf32, #tpu.memory_space<any>>
    %c0_i32_104 = arith.constant 0 : i32
    %c0_i32_105 = arith.constant 0 : i32
    %134 = tpu.memref_slice %arg4[%c0_i32_104, %c0_i32_105] : memref<4x128xf32, #tpu.memory_space<vmem>> -> memref<1x128xf32, #tpu.memory_space<vmem>>
    %135 = tpu.memref_slice %arg5[%c0_i32_102] : memref<4x!tpu.dma_semaphore, #tpu.memory_space<semaphore_mem>> -> memref<1x!tpu.dma_semaphore, #tpu.memory_space<semaphore_mem>>
    %136 = tpu.memref_squeeze %135 : memref<1x!tpu.dma_semaphore, #tpu.memory_space<semaphore_mem>> -> memref<!tpu.dma_semaphore, #tpu.memory_space<semaphore_mem>>
    tpu.wait_dma2 semaphore(%136 : memref<!tpu.dma_semaphore, #tpu.memory_space<semaphore_mem>>) src(%133 : memref<1x128xf32, #tpu.memory_space<any>>) dst(%134 : memref<1x128xf32, #tpu.memory_space<vmem>>)
    %c1_i32_106 = arith.constant 1 : i32
    %c0_i32_107 = arith.constant 0 : i32
    %137 = tpu.memref_slice %arg2[%114, %c0_i32_107] : memref<320x128xf32, #tpu.memory_space<any>> -> memref<1x128xf32, #tpu.memory_space<any>>
    %c1_i32_108 = arith.constant 1 : i32
    %c0_i32_109 = arith.constant 0 : i32
    %138 = tpu.memref_slice %arg4[%c1_i32_108, %c0_i32_109] : memref<4x128xf32, #tpu.memory_space<vmem>> -> memref<1x128xf32, #tpu.memory_space<vmem>>
    %139 = tpu.memref_slice %arg5[%c1_i32_106] : memref<4x!tpu.dma_semaphore, #tpu.memory_space<semaphore_mem>> -> memref<1x!tpu.dma_semaphore, #tpu.memory_space<semaphore_mem>>
    %140 = tpu.memref_squeeze %139 : memref<1x!tpu.dma_semaphore, #tpu.memory_space<semaphore_mem>> -> memref<!tpu.dma_semaphore, #tpu.memory_space<semaphore_mem>>
    tpu.wait_dma2 semaphore(%140 : memref<!tpu.dma_semaphore, #tpu.memory_space<semaphore_mem>>) src(%137 : memref<1x128xf32, #tpu.memory_space<any>>) dst(%138 : memref<1x128xf32, #tpu.memory_space<vmem>>)
    %c2_i32_110 = arith.constant 2 : i32
    %c0_i32_111 = arith.constant 0 : i32
    %141 = tpu.memref_slice %arg2[%121, %c0_i32_111] : memref<320x128xf32, #tpu.memory_space<any>> -> memref<1x128xf32, #tpu.memory_space<any>>
    %c2_i32_112 = arith.constant 2 : i32
    %c0_i32_113 = arith.constant 0 : i32
    %142 = tpu.memref_slice %arg4[%c2_i32_112, %c0_i32_113] : memref<4x128xf32, #tpu.memory_space<vmem>> -> memref<1x128xf32, #tpu.memory_space<vmem>>
    %143 = tpu.memref_slice %arg5[%c2_i32_110] : memref<4x!tpu.dma_semaphore, #tpu.memory_space<semaphore_mem>> -> memref<1x!tpu.dma_semaphore, #tpu.memory_space<semaphore_mem>>
    %144 = tpu.memref_squeeze %143 : memref<1x!tpu.dma_semaphore, #tpu.memory_space<semaphore_mem>> -> memref<!tpu.dma_semaphore, #tpu.memory_space<semaphore_mem>>
    tpu.wait_dma2 semaphore(%144 : memref<!tpu.dma_semaphore, #tpu.memory_space<semaphore_mem>>) src(%141 : memref<1x128xf32, #tpu.memory_space<any>>) dst(%142 : memref<1x128xf32, #tpu.memory_space<vmem>>)
    %c3_i32_114 = arith.constant 3 : i32
    %c0_i32_115 = arith.constant 0 : i32
    %145 = tpu.memref_slice %arg2[%128, %c0_i32_115] : memref<320x128xf32, #tpu.memory_space<any>> -> memref<1x128xf32, #tpu.memory_space<any>>
    %c3_i32_116 = arith.constant 3 : i32
    %c0_i32_117 = arith.constant 0 : i32
    %146 = tpu.memref_slice %arg4[%c3_i32_116, %c0_i32_117] : memref<4x128xf32, #tpu.memory_space<vmem>> -> memref<1x128xf32, #tpu.memory_space<vmem>>
    %147 = tpu.memref_slice %arg5[%c3_i32_114] : memref<4x!tpu.dma_semaphore, #tpu.memory_space<semaphore_mem>> -> memref<1x!tpu.dma_semaphore, #tpu.memory_space<semaphore_mem>>
    %148 = tpu.memref_squeeze %147 : memref<1x!tpu.dma_semaphore, #tpu.memory_space<semaphore_mem>> -> memref<!tpu.dma_semaphore, #tpu.memory_space<semaphore_mem>>
    tpu.wait_dma2 semaphore(%148 : memref<!tpu.dma_semaphore, #tpu.memory_space<semaphore_mem>>) src(%145 : memref<1x128xf32, #tpu.memory_space<any>>) dst(%146 : memref<1x128xf32, #tpu.memory_space<vmem>>)
    %c0_118 = arith.constant 0 : index
    %c0_119 = arith.constant 0 : index
    %149 = vector.load %arg4[%c0_118, %c0_119] : memref<4x128xf32, #tpu.memory_space<vmem>>, vector<4x128xf32>
    %cst_120 = arith.constant dense<0.000000e+00> : vector<128xf32>
    %150 = vector.multi_reduction <add>, %149, %cst_120 [0] : vector<4x128xf32> to vector<128xf32>
    %151 = vector.shape_cast %150 : vector<128xf32> to vector<1x128xf32>
    %c2 = arith.constant 2 : index
    %c0_121 = arith.constant 0 : index
    %152 = vector.load %arg3[%c2, %c0_121] : memref<8x128xf32, #tpu.memory_space<vmem>>, vector<1x128xf32>
    tpu.vector_store %arg3[%c2, %c0_121], %151 {strides = array<i32>} : memref<8x128xf32, #tpu.memory_space<vmem>>, vector<1x128xf32>,
    %c8_i32_122 = arith.constant 8 : i32
    %153 = arith.muli %arg0, %c8_i32_122 : i32
    %c3_i32_123 = arith.constant 3 : i32
    %154 = arith.addi %153, %c3_i32_123 : i32
    %c4_i32_124 = arith.constant 4 : i32
    %155 = arith.muli %154, %c4_i32_124 : i32
    %c0_i32_125 = arith.constant 0 : i32
    %156 = arith.addi %155, %c0_i32_125 : i32
    %157 = arith.index_cast %156 : i32 to index
    %158 = memref.load %arg1[%157] : memref<96xi32, #tpu.memory_space<smem>>
    %c0_i32_126 = arith.constant 0 : i32
    %c0_i32_127 = arith.constant 0 : i32
    %159 = tpu.memref_slice %arg2[%158, %c0_i32_127] : memref<320x128xf32, #tpu.memory_space<any>> -> memref<1x128xf32, #tpu.memory_space<any>>
    %c0_i32_128 = arith.constant 0 : i32
    %c0_i32_129 = arith.constant 0 : i32
    %160 = tpu.memref_slice %arg4[%c0_i32_128, %c0_i32_129] : memref<4x128xf32, #tpu.memory_space<vmem>> -> memref<1x128xf32, #tpu.memory_space<vmem>>
    %161 = tpu.memref_slice %arg5[%c0_i32_126] : memref<4x!tpu.dma_semaphore, #tpu.memory_space<semaphore_mem>> -> memref<1x!tpu.dma_semaphore, #tpu.memory_space<semaphore_mem>>
    %162 = tpu.memref_squeeze %161 : memref<1x!tpu.dma_semaphore, #tpu.memory_space<semaphore_mem>> -> memref<!tpu.dma_semaphore, #tpu.memory_space<semaphore_mem>>
    tpu.enqueue_dma source(%159 : memref<1x128xf32, #tpu.memory_space<any>>) target(%160 : memref<1x128xf32, #tpu.memory_space<vmem>>) target_semaphore(%162 : memref<!tpu.dma_semaphore, #tpu.memory_space<semaphore_mem>>)
    %c1_i32_130 = arith.constant 1 : i32
    %163 = arith.addi %155, %c1_i32_130 : i32
    %164 = arith.index_cast %163 : i32 to index
    %165 = memref.load %arg1[%164] : memref<96xi32, #tpu.memory_space<smem>>
    %c1_i32_131 = arith.constant 1 : i32
    %c0_i32_132 = arith.constant 0 : i32
    %166 = tpu.memref_slice %arg2[%165, %c0_i32_132] : memref<320x128xf32, #tpu.memory_space<any>> -> memref<1x128xf32, #tpu.memory_space<any>>
    %c1_i32_133 = arith.constant 1 : i32
    %c0_i32_134 = arith.constant 0 : i32
    %167 = tpu.memref_slice %arg4[%c1_i32_133, %c0_i32_134] : memref<4x128xf32, #tpu.memory_space<vmem>> -> memref<1x128xf32, #tpu.memory_space<vmem>>
    %168 = tpu.memref_slice %arg5[%c1_i32_131] : memref<4x!tpu.dma_semaphore, #tpu.memory_space<semaphore_mem>> -> memref<1x!tpu.dma_semaphore, #tpu.memory_space<semaphore_mem>>
    %169 = tpu.memref_squeeze %168 : memref<1x!tpu.dma_semaphore, #tpu.memory_space<semaphore_mem>> -> memref<!tpu.dma_semaphore, #tpu.memory_space<semaphore_mem>>
    tpu.enqueue_dma source(%166 : memref<1x128xf32, #tpu.memory_space<any>>) target(%167 : memref<1x128xf32, #tpu.memory_space<vmem>>) target_semaphore(%169 : memref<!tpu.dma_semaphore, #tpu.memory_space<semaphore_mem>>)
    %c2_i32_135 = arith.constant 2 : i32
    %170 = arith.addi %155, %c2_i32_135 : i32
    %171 = arith.index_cast %170 : i32 to index
    %172 = memref.load %arg1[%171] : memref<96xi32, #tpu.memory_space<smem>>
    %c2_i32_136 = arith.constant 2 : i32
    %c0_i32_137 = arith.constant 0 : i32
    %173 = tpu.memref_slice %arg2[%172, %c0_i32_137] : memref<320x128xf32, #tpu.memory_space<any>> -> memref<1x128xf32, #tpu.memory_space<any>>
    %c2_i32_138 = arith.constant 2 : i32
    %c0_i32_139 = arith.constant 0 : i32
    %174 = tpu.memref_slice %arg4[%c2_i32_138, %c0_i32_139] : memref<4x128xf32, #tpu.memory_space<vmem>> -> memref<1x128xf32, #tpu.memory_space<vmem>>
    %175 = tpu.memref_slice %arg5[%c2_i32_136] : memref<4x!tpu.dma_semaphore, #tpu.memory_space<semaphore_mem>> -> memref<1x!tpu.dma_semaphore, #tpu.memory_space<semaphore_mem>>
    %176 = tpu.memref_squeeze %175 : memref<1x!tpu.dma_semaphore, #tpu.memory_space<semaphore_mem>> -> memref<!tpu.dma_semaphore, #tpu.memory_space<semaphore_mem>>
    tpu.enqueue_dma source(%173 : memref<1x128xf32, #tpu.memory_space<any>>) target(%174 : memref<1x128xf32, #tpu.memory_space<vmem>>) target_semaphore(%176 : memref<!tpu.dma_semaphore, #tpu.memory_space<semaphore_mem>>)
    %c3_i32_140 = arith.constant 3 : i32
    %177 = arith.addi %155, %c3_i32_140 : i32
    %178 = arith.index_cast %177 : i32 to index
    %179 = memref.load %arg1[%178] : memref<96xi32, #tpu.memory_space<smem>>
    %c3_i32_141 = arith.constant 3 : i32
    %c0_i32_142 = arith.constant 0 : i32
    %180 = tpu.memref_slice %arg2[%179, %c0_i32_142] : memref<320x128xf32, #tpu.memory_space<any>> -> memref<1x128xf32, #tpu.memory_space<any>>
    %c3_i32_143 = arith.constant 3 : i32
    %c0_i32_144 = arith.constant 0 : i32
    %181 = tpu.memref_slice %arg4[%c3_i32_143, %c0_i32_144] : memref<4x128xf32, #tpu.memory_space<vmem>> -> memref<1x128xf32, #tpu.memory_space<vmem>>
    %182 = tpu.memref_slice %arg5[%c3_i32_141] : memref<4x!tpu.dma_semaphore, #tpu.memory_space<semaphore_mem>> -> memref<1x!tpu.dma_semaphore, #tpu.memory_space<semaphore_mem>>
    %183 = tpu.memref_squeeze %182 : memref<1x!tpu.dma_semaphore, #tpu.memory_space<semaphore_mem>> -> memref<!tpu.dma_semaphore, #tpu.memory_space<semaphore_mem>>
    tpu.enqueue_dma source(%180 : memref<1x128xf32, #tpu.memory_space<any>>) target(%181 : memref<1x128xf32, #tpu.memory_space<vmem>>) target_semaphore(%183 : memref<!tpu.dma_semaphore, #tpu.memory_space<semaphore_mem>>)
    %c0_i32_145 = arith.constant 0 : i32
    %c0_i32_146 = arith.constant 0 : i32
    %184 = tpu.memref_slice %arg2[%158, %c0_i32_146] : memref<320x128xf32, #tpu.memory_space<any>> -> memref<1x128xf32, #tpu.memory_space<any>>
    %c0_i32_147 = arith.constant 0 : i32
    %c0_i32_148 = arith.constant 0 : i32
    %185 = tpu.memref_slice %arg4[%c0_i32_147, %c0_i32_148] : memref<4x128xf32, #tpu.memory_space<vmem>> -> memref<1x128xf32, #tpu.memory_space<vmem>>
    %186 = tpu.memref_slice %arg5[%c0_i32_145] : memref<4x!tpu.dma_semaphore, #tpu.memory_space<semaphore_mem>> -> memref<1x!tpu.dma_semaphore, #tpu.memory_space<semaphore_mem>>
    %187 = tpu.memref_squeeze %186 : memref<1x!tpu.dma_semaphore, #tpu.memory_space<semaphore_mem>> -> memref<!tpu.dma_semaphore, #tpu.memory_space<semaphore_mem>>
    tpu.wait_dma2 semaphore(%187 : memref<!tpu.dma_semaphore, #tpu.memory_space<semaphore_mem>>) src(%184 : memref<1x128xf32, #tpu.memory_space<any>>) dst(%185 : memref<1x128xf32, #tpu.memory_space<vmem>>)
    %c1_i32_149 = arith.constant 1 : i32
    %c0_i32_150 = arith.constant 0 : i32
    %188 = tpu.memref_slice %arg2[%165, %c0_i32_150] : memref<320x128xf32, #tpu.memory_space<any>> -> memref<1x128xf32, #tpu.memory_space<any>>
    %c1_i32_151 = arith.constant 1 : i32
    %c0_i32_152 = arith.constant 0 : i32
    %189 = tpu.memref_slice %arg4[%c1_i32_151, %c0_i32_152] : memref<4x128xf32, #tpu.memory_space<vmem>> -> memref<1x128xf32, #tpu.memory_space<vmem>>
    %190 = tpu.memref_slice %arg5[%c1_i32_149] : memref<4x!tpu.dma_semaphore, #tpu.memory_space<semaphore_mem>> -> memref<1x!tpu.dma_semaphore, #tpu.memory_space<semaphore_mem>>
    %191 = tpu.memref_squeeze %190 : memref<1x!tpu.dma_semaphore, #tpu.memory_space<semaphore_mem>> -> memref<!tpu.dma_semaphore, #tpu.memory_space<semaphore_mem>>
    tpu.wait_dma2 semaphore(%191 : memref<!tpu.dma_semaphore, #tpu.memory_space<semaphore_mem>>) src(%188 : memref<1x128xf32, #tpu.memory_space<any>>) dst(%189 : memref<1x128xf32, #tpu.memory_space<vmem>>)
    %c2_i32_153 = arith.constant 2 : i32
    %c0_i32_154 = arith.constant 0 : i32
    %192 = tpu.memref_slice %arg2[%172, %c0_i32_154] : memref<320x128xf32, #tpu.memory_space<any>> -> memref<1x128xf32, #tpu.memory_space<any>>
    %c2_i32_155 = arith.constant 2 : i32
    %c0_i32_156 = arith.constant 0 : i32
    %193 = tpu.memref_slice %arg4[%c2_i32_155, %c0_i32_156] : memref<4x128xf32, #tpu.memory_space<vmem>> -> memref<1x128xf32, #tpu.memory_space<vmem>>
    %194 = tpu.memref_slice %arg5[%c2_i32_153] : memref<4x!tpu.dma_semaphore, #tpu.memory_space<semaphore_mem>> -> memref<1x!tpu.dma_semaphore, #tpu.memory_space<semaphore_mem>>
    %195 = tpu.memref_squeeze %194 : memref<1x!tpu.dma_semaphore, #tpu.memory_space<semaphore_mem>> -> memref<!tpu.dma_semaphore, #tpu.memory_space<semaphore_mem>>
    tpu.wait_dma2 semaphore(%195 : memref<!tpu.dma_semaphore, #tpu.memory_space<semaphore_mem>>) src(%192 : memref<1x128xf32, #tpu.memory_space<any>>) dst(%193 : memref<1x128xf32, #tpu.memory_space<vmem>>)
    %c3_i32_157 = arith.constant 3 : i32
    %c0_i32_158 = arith.constant 0 : i32
    %196 = tpu.memref_slice %arg2[%179, %c0_i32_158] : memref<320x128xf32, #tpu.memory_space<any>> -> memref<1x128xf32, #tpu.memory_space<any>>
    %c3_i32_159 = arith.constant 3 : i32
    %c0_i32_160 = arith.constant 0 : i32
    %197 = tpu.memref_slice %arg4[%c3_i32_159, %c0_i32_160] : memref<4x128xf32, #tpu.memory_space<vmem>> -> memref<1x128xf32, #tpu.memory_space<vmem>>
    %198 = tpu.memref_slice %arg5[%c3_i32_157] : memref<4x!tpu.dma_semaphore, #tpu.memory_space<semaphore_mem>> -> memref<1x!tpu.dma_semaphore, #tpu.memory_space<semaphore_mem>>
    %199 = tpu.memref_squeeze %198 : memref<1x!tpu.dma_semaphore, #tpu.memory_space<semaphore_mem>> -> memref<!tpu.dma_semaphore, #tpu.memory_space<semaphore_mem>>
    tpu.wait_dma2 semaphore(%199 : memref<!tpu.dma_semaphore, #tpu.memory_space<semaphore_mem>>) src(%196 : memref<1x128xf32, #tpu.memory_space<any>>) dst(%197 : memref<1x128xf32, #tpu.memory_space<vmem>>)
    %c0_161 = arith.constant 0 : index
    %c0_162 = arith.constant 0 : index
    %200 = vector.load %arg4[%c0_161, %c0_162] : memref<4x128xf32, #tpu.memory_space<vmem>>, vector<4x128xf32>
    %cst_163 = arith.constant dense<0.000000e+00> : vector<128xf32>
    %201 = vector.multi_reduction <add>, %200, %cst_163 [0] : vector<4x128xf32> to vector<128xf32>
    %202 = vector.shape_cast %201 : vector<128xf32> to vector<1x128xf32>
    %c3 = arith.constant 3 : index
    %c0_164 = arith.constant 0 : index
    %203 = vector.load %arg3[%c3, %c0_164] : memref<8x128xf32, #tpu.memory_space<vmem>>, vector<1x128xf32>
    tpu.vector_store %arg3[%c3, %c0_164], %202 {strides = array<i32>} : memref<8x128xf32, #tpu.memory_space<vmem>>, vector<1x128xf32>,
    %c8_i32_165 = arith.constant 8 : i32
    %204 = arith.muli %arg0, %c8_i32_165 : i32
    %c4_i32_166 = arith.constant 4 : i32
    %205 = arith.addi %204, %c4_i32_166 : i32
    %c4_i32_167 = arith.constant 4 : i32
    %206 = arith.muli %205, %c4_i32_167 : i32
    %c0_i32_168 = arith.constant 0 : i32
    %207 = arith.addi %206, %c0_i32_168 : i32
    %208 = arith.index_cast %207 : i32 to index
    %209 = memref.load %arg1[%208] : memref<96xi32, #tpu.memory_space<smem>>
    %c0_i32_169 = arith.constant 0 : i32
    %c0_i32_170 = arith.constant 0 : i32
    %210 = tpu.memref_slice %arg2[%209, %c0_i32_170] : memref<320x128xf32, #tpu.memory_space<any>> -> memref<1x128xf32, #tpu.memory_space<any>>
    %c0_i32_171 = arith.constant 0 : i32
    %c0_i32_172 = arith.constant 0 : i32
    %211 = tpu.memref_slice %arg4[%c0_i32_171, %c0_i32_172] : memref<4x128xf32, #tpu.memory_space<vmem>> -> memref<1x128xf32, #tpu.memory_space<vmem>>
    %212 = tpu.memref_slice %arg5[%c0_i32_169] : memref<4x!tpu.dma_semaphore, #tpu.memory_space<semaphore_mem>> -> memref<1x!tpu.dma_semaphore, #tpu.memory_space<semaphore_mem>>
    %213 = tpu.memref_squeeze %212 : memref<1x!tpu.dma_semaphore, #tpu.memory_space<semaphore_mem>> -> memref<!tpu.dma_semaphore, #tpu.memory_space<semaphore_mem>>
    tpu.enqueue_dma source(%210 : memref<1x128xf32, #tpu.memory_space<any>>) target(%211 : memref<1x128xf32, #tpu.memory_space<vmem>>) target_semaphore(%213 : memref<!tpu.dma_semaphore, #tpu.memory_space<semaphore_mem>>)
    %c1_i32_173 = arith.constant 1 : i32
    %214 = arith.addi %206, %c1_i32_173 : i32
    %215 = arith.index_cast %214 : i32 to index
    %216 = memref.load %arg1[%215] : memref<96xi32, #tpu.memory_space<smem>>
    %c1_i32_174 = arith.constant 1 : i32
    %c0_i32_175 = arith.constant 0 : i32
    %217 = tpu.memref_slice %arg2[%216, %c0_i32_175] : memref<320x128xf32, #tpu.memory_space<any>> -> memref<1x128xf32, #tpu.memory_space<any>>
    %c1_i32_176 = arith.constant 1 : i32
    %c0_i32_177 = arith.constant 0 : i32
    %218 = tpu.memref_slice %arg4[%c1_i32_176, %c0_i32_177] : memref<4x128xf32, #tpu.memory_space<vmem>> -> memref<1x128xf32, #tpu.memory_space<vmem>>
    %219 = tpu.memref_slice %arg5[%c1_i32_174] : memref<4x!tpu.dma_semaphore, #tpu.memory_space<semaphore_mem>> -> memref<1x!tpu.dma_semaphore, #tpu.memory_space<semaphore_mem>>
    %220 = tpu.memref_squeeze %219 : memref<1x!tpu.dma_semaphore, #tpu.memory_space<semaphore_mem>> -> memref<!tpu.dma_semaphore, #tpu.memory_space<semaphore_mem>>
    tpu.enqueue_dma source(%217 : memref<1x128xf32, #tpu.memory_space<any>>) target(%218 : memref<1x128xf32, #tpu.memory_space<vmem>>) target_semaphore(%220 : memref<!tpu.dma_semaphore, #tpu.memory_space<semaphore_mem>>)
    %c2_i32_178 = arith.constant 2 : i32
    %221 = arith.addi %206, %c2_i32_178 : i32
    %222 = arith.index_cast %221 : i32 to index
    %223 = memref.load %arg1[%222] : memref<96xi32, #tpu.memory_space<smem>>
    %c2_i32_179 = arith.constant 2 : i32
    %c0_i32_180 = arith.constant 0 : i32
    %224 = tpu.memref_slice %arg2[%223, %c0_i32_180] : memref<320x128xf32, #tpu.memory_space<any>> -> memref<1x128xf32, #tpu.memory_space<any>>
    %c2_i32_181 = arith.constant 2 : i32
    %c0_i32_182 = arith.constant 0 : i32
    %225 = tpu.memref_slice %arg4[%c2_i32_181, %c0_i32_182] : memref<4x128xf32, #tpu.memory_space<vmem>> -> memref<1x128xf32, #tpu.memory_space<vmem>>
    %226 = tpu.memref_slice %arg5[%c2_i32_179] : memref<4x!tpu.dma_semaphore, #tpu.memory_space<semaphore_mem>> -> memref<1x!tpu.dma_semaphore, #tpu.memory_space<semaphore_mem>>
    %227 = tpu.memref_squeeze %226 : memref<1x!tpu.dma_semaphore, #tpu.memory_space<semaphore_mem>> -> memref<!tpu.dma_semaphore, #tpu.memory_space<semaphore_mem>>
    tpu.enqueue_dma source(%224 : memref<1x128xf32, #tpu.memory_space<any>>) target(%225 : memref<1x128xf32, #tpu.memory_space<vmem>>) target_semaphore(%227 : memref<!tpu.dma_semaphore, #tpu.memory_space<semaphore_mem>>)
    %c3_i32_183 = arith.constant 3 : i32
    %228 = arith.addi %206, %c3_i32_183 : i32
    %229 = arith.index_cast %228 : i32 to index
    %230 = memref.load %arg1[%229] : memref<96xi32, #tpu.memory_space<smem>>
    %c3_i32_184 = arith.constant 3 : i32
    %c0_i32_185 = arith.constant 0 : i32
    %231 = tpu.memref_slice %arg2[%230, %c0_i32_185] : memref<320x128xf32, #tpu.memory_space<any>> -> memref<1x128xf32, #tpu.memory_space<any>>
    %c3_i32_186 = arith.constant 3 : i32
    %c0_i32_187 = arith.constant 0 : i32
    %232 = tpu.memref_slice %arg4[%c3_i32_186, %c0_i32_187] : memref<4x128xf32, #tpu.memory_space<vmem>> -> memref<1x128xf32, #tpu.memory_space<vmem>>
    %233 = tpu.memref_slice %arg5[%c3_i32_184] : memref<4x!tpu.dma_semaphore, #tpu.memory_space<semaphore_mem>> -> memref<1x!tpu.dma_semaphore, #tpu.memory_space<semaphore_mem>>
    %234 = tpu.memref_squeeze %233 : memref<1x!tpu.dma_semaphore, #tpu.memory_space<semaphore_mem>> -> memref<!tpu.dma_semaphore, #tpu.memory_space<semaphore_mem>>
    tpu.enqueue_dma source(%231 : memref<1x128xf32, #tpu.memory_space<any>>) target(%232 : memref<1x128xf32, #tpu.memory_space<vmem>>) target_semaphore(%234 : memref<!tpu.dma_semaphore, #tpu.memory_space<semaphore_mem>>)
    %c0_i32_188 = arith.constant 0 : i32
    %c0_i32_189 = arith.constant 0 : i32
    %235 = tpu.memref_slice %arg2[%209, %c0_i32_189] : memref<320x128xf32, #tpu.memory_space<any>> -> memref<1x128xf32, #tpu.memory_space<any>>
    %c0_i32_190 = arith.constant 0 : i32
    %c0_i32_191 = arith.constant 0 : i32
    %236 = tpu.memref_slice %arg4[%c0_i32_190, %c0_i32_191] : memref<4x128xf32, #tpu.memory_space<vmem>> -> memref<1x128xf32, #tpu.memory_space<vmem>>
    %237 = tpu.memref_slice %arg5[%c0_i32_188] : memref<4x!tpu.dma_semaphore, #tpu.memory_space<semaphore_mem>> -> memref<1x!tpu.dma_semaphore, #tpu.memory_space<semaphore_mem>>
    %238 = tpu.memref_squeeze %237 : memref<1x!tpu.dma_semaphore, #tpu.memory_space<semaphore_mem>> -> memref<!tpu.dma_semaphore, #tpu.memory_space<semaphore_mem>>
    tpu.wait_dma2 semaphore(%238 : memref<!tpu.dma_semaphore, #tpu.memory_space<semaphore_mem>>) src(%235 : memref<1x128xf32, #tpu.memory_space<any>>) dst(%236 : memref<1x128xf32, #tpu.memory_space<vmem>>)
    %c1_i32_192 = arith.constant 1 : i32
    %c0_i32_193 = arith.constant 0 : i32
    %239 = tpu.memref_slice %arg2[%216, %c0_i32_193] : memref<320x128xf32, #tpu.memory_space<any>> -> memref<1x128xf32, #tpu.memory_space<any>>
    %c1_i32_194 = arith.constant 1 : i32
    %c0_i32_195 = arith.constant 0 : i32
    %240 = tpu.memref_slice %arg4[%c1_i32_194, %c0_i32_195] : memref<4x128xf32, #tpu.memory_space<vmem>> -> memref<1x128xf32, #tpu.memory_space<vmem>>
    %241 = tpu.memref_slice %arg5[%c1_i32_192] : memref<4x!tpu.dma_semaphore, #tpu.memory_space<semaphore_mem>> -> memref<1x!tpu.dma_semaphore, #tpu.memory_space<semaphore_mem>>
    %242 = tpu.memref_squeeze %241 : memref<1x!tpu.dma_semaphore, #tpu.memory_space<semaphore_mem>> -> memref<!tpu.dma_semaphore, #tpu.memory_space<semaphore_mem>>
    tpu.wait_dma2 semaphore(%242 : memref<!tpu.dma_semaphore, #tpu.memory_space<semaphore_mem>>) src(%239 : memref<1x128xf32, #tpu.memory_space<any>>) dst(%240 : memref<1x128xf32, #tpu.memory_space<vmem>>)
    %c2_i32_196 = arith.constant 2 : i32
    %c0_i32_197 = arith.constant 0 : i32
    %243 = tpu.memref_slice %arg2[%223, %c0_i32_197] : memref<320x128xf32, #tpu.memory_space<any>> -> memref<1x128xf32, #tpu.memory_space<any>>
    %c2_i32_198 = arith.constant 2 : i32
    %c0_i32_199 = arith.constant 0 : i32
    %244 = tpu.memref_slice %arg4[%c2_i32_198, %c0_i32_199] : memref<4x128xf32, #tpu.memory_space<vmem>> -> memref<1x128xf32, #tpu.memory_space<vmem>>
    %245 = tpu.memref_slice %arg5[%c2_i32_196] : memref<4x!tpu.dma_semaphore, #tpu.memory_space<semaphore_mem>> -> memref<1x!tpu.dma_semaphore, #tpu.memory_space<semaphore_mem>>
    %246 = tpu.memref_squeeze %245 : memref<1x!tpu.dma_semaphore, #tpu.memory_space<semaphore_mem>> -> memref<!tpu.dma_semaphore, #tpu.memory_space<semaphore_mem>>
    tpu.wait_dma2 semaphore(%246 : memref<!tpu.dma_semaphore, #tpu.memory_space<semaphore_mem>>) src(%243 : memref<1x128xf32, #tpu.memory_space<any>>) dst(%244 : memref<1x128xf32, #tpu.memory_space<vmem>>)
    %c3_i32_200 = arith.constant 3 : i32
    %c0_i32_201 = arith.constant 0 : i32
    %247 = tpu.memref_slice %arg2[%230, %c0_i32_201] : memref<320x128xf32, #tpu.memory_space<any>> -> memref<1x128xf32, #tpu.memory_space<any>>
    %c3_i32_202 = arith.constant 3 : i32
    %c0_i32_203 = arith.constant 0 : i32
    %248 = tpu.memref_slice %arg4[%c3_i32_202, %c0_i32_203] : memref<4x128xf32, #tpu.memory_space<vmem>> -> memref<1x128xf32, #tpu.memory_space<vmem>>
    %249 = tpu.memref_slice %arg5[%c3_i32_200] : memref<4x!tpu.dma_semaphore, #tpu.memory_space<semaphore_mem>> -> memref<1x!tpu.dma_semaphore, #tpu.memory_space<semaphore_mem>>
    %250 = tpu.memref_squeeze %249 : memref<1x!tpu.dma_semaphore, #tpu.memory_space<semaphore_mem>> -> memref<!tpu.dma_semaphore, #tpu.memory_space<semaphore_mem>>
    tpu.wait_dma2 semaphore(%250 : memref<!tpu.dma_semaphore, #tpu.memory_space<semaphore_mem>>) src(%247 : memref<1x128xf32, #tpu.memory_space<any>>) dst(%248 : memref<1x128xf32, #tpu.memory_space<vmem>>)
    %c0_204 = arith.constant 0 : index
    %c0_205 = arith.constant 0 : index
    %251 = vector.load %arg4[%c0_204, %c0_205] : memref<4x128xf32, #tpu.memory_space<vmem>>, vector<4x128xf32>
    %cst_206 = arith.constant dense<0.000000e+00> : vector<128xf32>
    %252 = vector.multi_reduction <add>, %251, %cst_206 [0] : vector<4x128xf32> to vector<128xf32>
    %253 = vector.shape_cast %252 : vector<128xf32> to vector<1x128xf32>
    %c4 = arith.constant 4 : index
    %c0_207 = arith.constant 0 : index
    %254 = vector.load %arg3[%c4, %c0_207] : memref<8x128xf32, #tpu.memory_space<vmem>>, vector<1x128xf32>
    tpu.vector_store %arg3[%c4, %c0_207], %253 {strides = array<i32>} : memref<8x128xf32, #tpu.memory_space<vmem>>, vector<1x128xf32>,
    %c8_i32_208 = arith.constant 8 : i32
    %255 = arith.muli %arg0, %c8_i32_208 : i32
    %c5_i32 = arith.constant 5 : i32
    %256 = arith.addi %255, %c5_i32 : i32
    %c4_i32_209 = arith.constant 4 : i32
    %257 = arith.muli %256, %c4_i32_209 : i32
    %c0_i32_210 = arith.constant 0 : i32
    %258 = arith.addi %257, %c0_i32_210 : i32
    %259 = arith.index_cast %258 : i32 to index
    %260 = memref.load %arg1[%259] : memref<96xi32, #tpu.memory_space<smem>>
    %c0_i32_211 = arith.constant 0 : i32
    %c0_i32_212 = arith.constant 0 : i32
    %261 = tpu.memref_slice %arg2[%260, %c0_i32_212] : memref<320x128xf32, #tpu.memory_space<any>> -> memref<1x128xf32, #tpu.memory_space<any>>
    %c0_i32_213 = arith.constant 0 : i32
    %c0_i32_214 = arith.constant 0 : i32
    %262 = tpu.memref_slice %arg4[%c0_i32_213, %c0_i32_214] : memref<4x128xf32, #tpu.memory_space<vmem>> -> memref<1x128xf32, #tpu.memory_space<vmem>>
    %263 = tpu.memref_slice %arg5[%c0_i32_211] : memref<4x!tpu.dma_semaphore, #tpu.memory_space<semaphore_mem>> -> memref<1x!tpu.dma_semaphore, #tpu.memory_space<semaphore_mem>>
    %264 = tpu.memref_squeeze %263 : memref<1x!tpu.dma_semaphore, #tpu.memory_space<semaphore_mem>> -> memref<!tpu.dma_semaphore, #tpu.memory_space<semaphore_mem>>
    tpu.enqueue_dma source(%261 : memref<1x128xf32, #tpu.memory_space<any>>) target(%262 : memref<1x128xf32, #tpu.memory_space<vmem>>) target_semaphore(%264 : memref<!tpu.dma_semaphore, #tpu.memory_space<semaphore_mem>>)
    %c1_i32_215 = arith.constant 1 : i32
    %265 = arith.addi %257, %c1_i32_215 : i32
    %266 = arith.index_cast %265 : i32 to index
    %267 = memref.load %arg1[%266] : memref<96xi32, #tpu.memory_space<smem>>
    %c1_i32_216 = arith.constant 1 : i32
    %c0_i32_217 = arith.constant 0 : i32
    %268 = tpu.memref_slice %arg2[%267, %c0_i32_217] : memref<320x128xf32, #tpu.memory_space<any>> -> memref<1x128xf32, #tpu.memory_space<any>>
    %c1_i32_218 = arith.constant 1 : i32
    %c0_i32_219 = arith.constant 0 : i32
    %269 = tpu.memref_slice %arg4[%c1_i32_218, %c0_i32_219] : memref<4x128xf32, #tpu.memory_space<vmem>> -> memref<1x128xf32, #tpu.memory_space<vmem>>
    %270 = tpu.memref_slice %arg5[%c1_i32_216] : memref<4x!tpu.dma_semaphore, #tpu.memory_space<semaphore_mem>> -> memref<1x!tpu.dma_semaphore, #tpu.memory_space<semaphore_mem>>
    %271 = tpu.memref_squeeze %270 : memref<1x!tpu.dma_semaphore, #tpu.memory_space<semaphore_mem>> -> memref<!tpu.dma_semaphore, #tpu.memory_space<semaphore_mem>>
    tpu.enqueue_dma source(%268 : memref<1x128xf32, #tpu.memory_space<any>>) target(%269 : memref<1x128xf32, #tpu.memory_space<vmem>>) target_semaphore(%271 : memref<!tpu.dma_semaphore, #tpu.memory_space<semaphore_mem>>)
    %c2_i32_220 = arith.constant 2 : i32
    %272 = arith.addi %257, %c2_i32_220 : i32
    %273 = arith.index_cast %272 : i32 to index
    %274 = memref.load %arg1[%273] : memref<96xi32, #tpu.memory_space<smem>>
    %c2_i32_221 = arith.constant 2 : i32
    %c0_i32_222 = arith.constant 0 : i32
    %275 = tpu.memref_slice %arg2[%274, %c0_i32_222] : memref<320x128xf32, #tpu.memory_space<any>> -> memref<1x128xf32, #tpu.memory_space<any>>
    %c2_i32_223 = arith.constant 2 : i32
    %c0_i32_224 = arith.constant 0 : i32
    %276 = tpu.memref_slice %arg4[%c2_i32_223, %c0_i32_224] : memref<4x128xf32, #tpu.memory_space<vmem>> -> memref<1x128xf32, #tpu.memory_space<vmem>>
    %277 = tpu.memref_slice %arg5[%c2_i32_221] : memref<4x!tpu.dma_semaphore, #tpu.memory_space<semaphore_mem>> -> memref<1x!tpu.dma_semaphore, #tpu.memory_space<semaphore_mem>>
    %278 = tpu.memref_squeeze %277 : memref<1x!tpu.dma_semaphore, #tpu.memory_space<semaphore_mem>> -> memref<!tpu.dma_semaphore, #tpu.memory_space<semaphore_mem>>
    tpu.enqueue_dma source(%275 : memref<1x128xf32, #tpu.memory_space<any>>) target(%276 : memref<1x128xf32, #tpu.memory_space<vmem>>) target_semaphore(%278 : memref<!tpu.dma_semaphore, #tpu.memory_space<semaphore_mem>>)
    %c3_i32_225 = arith.constant 3 : i32
    %279 = arith.addi %257, %c3_i32_225 : i32
    %280 = arith.index_cast %279 : i32 to index
    %281 = memref.load %arg1[%280] : memref<96xi32, #tpu.memory_space<smem>>
    %c3_i32_226 = arith.constant 3 : i32
    %c0_i32_227 = arith.constant 0 : i32
    %282 = tpu.memref_slice %arg2[%281, %c0_i32_227] : memref<320x128xf32, #tpu.memory_space<any>> -> memref<1x128xf32, #tpu.memory_space<any>>
    %c3_i32_228 = arith.constant 3 : i32
    %c0_i32_229 = arith.constant 0 : i32
    %283 = tpu.memref_slice %arg4[%c3_i32_228, %c0_i32_229] : memref<4x128xf32, #tpu.memory_space<vmem>> -> memref<1x128xf32, #tpu.memory_space<vmem>>
    %284 = tpu.memref_slice %arg5[%c3_i32_226] : memref<4x!tpu.dma_semaphore, #tpu.memory_space<semaphore_mem>> -> memref<1x!tpu.dma_semaphore, #tpu.memory_space<semaphore_mem>>
    %285 = tpu.memref_squeeze %284 : memref<1x!tpu.dma_semaphore, #tpu.memory_space<semaphore_mem>> -> memref<!tpu.dma_semaphore, #tpu.memory_space<semaphore_mem>>
    tpu.enqueue_dma source(%282 : memref<1x128xf32, #tpu.memory_space<any>>) target(%283 : memref<1x128xf32, #tpu.memory_space<vmem>>) target_semaphore(%285 : memref<!tpu.dma_semaphore, #tpu.memory_space<semaphore_mem>>)
    %c0_i32_230 = arith.constant 0 : i32
    %c0_i32_231 = arith.constant 0 : i32
    %286 = tpu.memref_slice %arg2[%260, %c0_i32_231] : memref<320x128xf32, #tpu.memory_space<any>> -> memref<1x128xf32, #tpu.memory_space<any>>
    %c0_i32_232 = arith.constant 0 : i32
    %c0_i32_233 = arith.constant 0 : i32
    %287 = tpu.memref_slice %arg4[%c0_i32_232, %c0_i32_233] : memref<4x128xf32, #tpu.memory_space<vmem>> -> memref<1x128xf32, #tpu.memory_space<vmem>>
    %288 = tpu.memref_slice %arg5[%c0_i32_230] : memref<4x!tpu.dma_semaphore, #tpu.memory_space<semaphore_mem>> -> memref<1x!tpu.dma_semaphore, #tpu.memory_space<semaphore_mem>>
    %289 = tpu.memref_squeeze %288 : memref<1x!tpu.dma_semaphore, #tpu.memory_space<semaphore_mem>> -> memref<!tpu.dma_semaphore, #tpu.memory_space<semaphore_mem>>
    tpu.wait_dma2 semaphore(%289 : memref<!tpu.dma_semaphore, #tpu.memory_space<semaphore_mem>>) src(%286 : memref<1x128xf32, #tpu.memory_space<any>>) dst(%287 : memref<1x128xf32, #tpu.memory_space<vmem>>)
    %c1_i32_234 = arith.constant 1 : i32
    %c0_i32_235 = arith.constant 0 : i32
    %290 = tpu.memref_slice %arg2[%267, %c0_i32_235] : memref<320x128xf32, #tpu.memory_space<any>> -> memref<1x128xf32, #tpu.memory_space<any>>
    %c1_i32_236 = arith.constant 1 : i32
    %c0_i32_237 = arith.constant 0 : i32
    %291 = tpu.memref_slice %arg4[%c1_i32_236, %c0_i32_237] : memref<4x128xf32, #tpu.memory_space<vmem>> -> memref<1x128xf32, #tpu.memory_space<vmem>>
    %292 = tpu.memref_slice %arg5[%c1_i32_234] : memref<4x!tpu.dma_semaphore, #tpu.memory_space<semaphore_mem>> -> memref<1x!tpu.dma_semaphore, #tpu.memory_space<semaphore_mem>>
    %293 = tpu.memref_squeeze %292 : memref<1x!tpu.dma_semaphore, #tpu.memory_space<semaphore_mem>> -> memref<!tpu.dma_semaphore, #tpu.memory_space<semaphore_mem>>
    tpu.wait_dma2 semaphore(%293 : memref<!tpu.dma_semaphore, #tpu.memory_space<semaphore_mem>>) src(%290 : memref<1x128xf32, #tpu.memory_space<any>>) dst(%291 : memref<1x128xf32, #tpu.memory_space<vmem>>)
    %c2_i32_238 = arith.constant 2 : i32
    %c0_i32_239 = arith.constant 0 : i32
    %294 = tpu.memref_slice %arg2[%274, %c0_i32_239] : memref<320x128xf32, #tpu.memory_space<any>> -> memref<1x128xf32, #tpu.memory_space<any>>
    %c2_i32_240 = arith.constant 2 : i32
    %c0_i32_241 = arith.constant 0 : i32
    %295 = tpu.memref_slice %arg4[%c2_i32_240, %c0_i32_241] : memref<4x128xf32, #tpu.memory_space<vmem>> -> memref<1x128xf32, #tpu.memory_space<vmem>>
    %296 = tpu.memref_slice %arg5[%c2_i32_238] : memref<4x!tpu.dma_semaphore, #tpu.memory_space<semaphore_mem>> -> memref<1x!tpu.dma_semaphore, #tpu.memory_space<semaphore_mem>>
    %297 = tpu.memref_squeeze %296 : memref<1x!tpu.dma_semaphore, #tpu.memory_space<semaphore_mem>> -> memref<!tpu.dma_semaphore, #tpu.memory_space<semaphore_mem>>
    tpu.wait_dma2 semaphore(%297 : memref<!tpu.dma_semaphore, #tpu.memory_space<semaphore_mem>>) src(%294 : memref<1x128xf32, #tpu.memory_space<any>>) dst(%295 : memref<1x128xf32, #tpu.memory_space<vmem>>)
    %c3_i32_242 = arith.constant 3 : i32
    %c0_i32_243 = arith.constant 0 : i32
    %298 = tpu.memref_slice %arg2[%281, %c0_i32_243] : memref<320x128xf32, #tpu.memory_space<any>> -> memref<1x128xf32, #tpu.memory_space<any>>
    %c3_i32_244 = arith.constant 3 : i32
    %c0_i32_245 = arith.constant 0 : i32
    %299 = tpu.memref_slice %arg4[%c3_i32_244, %c0_i32_245] : memref<4x128xf32, #tpu.memory_space<vmem>> -> memref<1x128xf32, #tpu.memory_space<vmem>>
    %300 = tpu.memref_slice %arg5[%c3_i32_242] : memref<4x!tpu.dma_semaphore, #tpu.memory_space<semaphore_mem>> -> memref<1x!tpu.dma_semaphore, #tpu.memory_space<semaphore_mem>>
    %301 = tpu.memref_squeeze %300 : memref<1x!tpu.dma_semaphore, #tpu.memory_space<semaphore_mem>> -> memref<!tpu.dma_semaphore, #tpu.memory_space<semaphore_mem>>
    tpu.wait_dma2 semaphore(%301 : memref<!tpu.dma_semaphore, #tpu.memory_space<semaphore_mem>>) src(%298 : memref<1x128xf32, #tpu.memory_space<any>>) dst(%299 : memref<1x128xf32, #tpu.memory_space<vmem>>)
    %c0_246 = arith.constant 0 : index
    %c0_247 = arith.constant 0 : index
    %302 = vector.load %arg4[%c0_246, %c0_247] : memref<4x128xf32, #tpu.memory_space<vmem>>, vector<4x128xf32>
    %cst_248 = arith.constant dense<0.000000e+00> : vector<128xf32>
    %303 = vector.multi_reduction <add>, %302, %cst_248 [0] : vector<4x128xf32> to vector<128xf32>
    %304 = vector.shape_cast %303 : vector<128xf32> to vector<1x128xf32>
    %c5 = arith.constant 5 : index
    %c0_249 = arith.constant 0 : index
    %305 = vector.load %arg3[%c5, %c0_249] : memref<8x128xf32, #tpu.memory_space<vmem>>, vector<1x128xf32>
    tpu.vector_store %arg3[%c5, %c0_249], %304 {strides = array<i32>} : memref<8x128xf32, #tpu.memory_space<vmem>>, vector<1x128xf32>,
    %c8_i32_250 = arith.constant 8 : i32
    %306 = arith.muli %arg0, %c8_i32_250 : i32
    %c6_i32 = arith.constant 6 : i32
    %307 = arith.addi %306, %c6_i32 : i32
    %c4_i32_251 = arith.constant 4 : i32
    %308 = arith.muli %307, %c4_i32_251 : i32
    %c0_i32_252 = arith.constant 0 : i32
    %309 = arith.addi %308, %c0_i32_252 : i32
    %310 = arith.index_cast %309 : i32 to index
    %311 = memref.load %arg1[%310] : memref<96xi32, #tpu.memory_space<smem>>
    %c0_i32_253 = arith.constant 0 : i32
    %c0_i32_254 = arith.constant 0 : i32
    %312 = tpu.memref_slice %arg2[%311, %c0_i32_254] : memref<320x128xf32, #tpu.memory_space<any>> -> memref<1x128xf32, #tpu.memory_space<any>>
    %c0_i32_255 = arith.constant 0 : i32
    %c0_i32_256 = arith.constant 0 : i32
    %313 = tpu.memref_slice %arg4[%c0_i32_255, %c0_i32_256] : memref<4x128xf32, #tpu.memory_space<vmem>> -> memref<1x128xf32, #tpu.memory_space<vmem>>
    %314 = tpu.memref_slice %arg5[%c0_i32_253] : memref<4x!tpu.dma_semaphore, #tpu.memory_space<semaphore_mem>> -> memref<1x!tpu.dma_semaphore, #tpu.memory_space<semaphore_mem>>
    %315 = tpu.memref_squeeze %314 : memref<1x!tpu.dma_semaphore, #tpu.memory_space<semaphore_mem>> -> memref<!tpu.dma_semaphore, #tpu.memory_space<semaphore_mem>>
    tpu.enqueue_dma source(%312 : memref<1x128xf32, #tpu.memory_space<any>>) target(%313 : memref<1x128xf32, #tpu.memory_space<vmem>>) target_semaphore(%315 : memref<!tpu.dma_semaphore, #tpu.memory_space<semaphore_mem>>)
    %c1_i32_257 = arith.constant 1 : i32
    %316 = arith.addi %308, %c1_i32_257 : i32
    %317 = arith.index_cast %316 : i32 to index
    %318 = memref.load %arg1[%317] : memref<96xi32, #tpu.memory_space<smem>>
    %c1_i32_258 = arith.constant 1 : i32
    %c0_i32_259 = arith.constant 0 : i32
    %319 = tpu.memref_slice %arg2[%318, %c0_i32_259] : memref<320x128xf32, #tpu.memory_space<any>> -> memref<1x128xf32, #tpu.memory_space<any>>
    %c1_i32_260 = arith.constant 1 : i32
    %c0_i32_261 = arith.constant 0 : i32
    %320 = tpu.memref_slice %arg4[%c1_i32_260, %c0_i32_261] : memref<4x128xf32, #tpu.memory_space<vmem>> -> memref<1x128xf32, #tpu.memory_space<vmem>>
    %321 = tpu.memref_slice %arg5[%c1_i32_258] : memref<4x!tpu.dma_semaphore, #tpu.memory_space<semaphore_mem>> -> memref<1x!tpu.dma_semaphore, #tpu.memory_space<semaphore_mem>>
    %322 = tpu.memref_squeeze %321 : memref<1x!tpu.dma_semaphore, #tpu.memory_space<semaphore_mem>> -> memref<!tpu.dma_semaphore, #tpu.memory_space<semaphore_mem>>
    tpu.enqueue_dma source(%319 : memref<1x128xf32, #tpu.memory_space<any>>) target(%320 : memref<1x128xf32, #tpu.memory_space<vmem>>) target_semaphore(%322 : memref<!tpu.dma_semaphore, #tpu.memory_space<semaphore_mem>>)
    %c2_i32_262 = arith.constant 2 : i32
    %323 = arith.addi %308, %c2_i32_262 : i32
    %324 = arith.index_cast %323 : i32 to index
    %325 = memref.load %arg1[%324] : memref<96xi32, #tpu.memory_space<smem>>
    %c2_i32_263 = arith.constant 2 : i32
    %c0_i32_264 = arith.constant 0 : i32
    %326 = tpu.memref_slice %arg2[%325, %c0_i32_264] : memref<320x128xf32, #tpu.memory_space<any>> -> memref<1x128xf32, #tpu.memory_space<any>>
    %c2_i32_265 = arith.constant 2 : i32
    %c0_i32_266 = arith.constant 0 : i32
    %327 = tpu.memref_slice %arg4[%c2_i32_265, %c0_i32_266] : memref<4x128xf32, #tpu.memory_space<vmem>> -> memref<1x128xf32, #tpu.memory_space<vmem>>
    %328 = tpu.memref_slice %arg5[%c2_i32_263] : memref<4x!tpu.dma_semaphore, #tpu.memory_space<semaphore_mem>> -> memref<1x!tpu.dma_semaphore, #tpu.memory_space<semaphore_mem>>
    %329 = tpu.memref_squeeze %328 : memref<1x!tpu.dma_semaphore, #tpu.memory_space<semaphore_mem>> -> memref<!tpu.dma_semaphore, #tpu.memory_space<semaphore_mem>>
    tpu.enqueue_dma source(%326 : memref<1x128xf32, #tpu.memory_space<any>>) target(%327 : memref<1x128xf32, #tpu.memory_space<vmem>>) target_semaphore(%329 : memref<!tpu.dma_semaphore, #tpu.memory_space<semaphore_mem>>)
    %c3_i32_267 = arith.constant 3 : i32
    %330 = arith.addi %308, %c3_i32_267 : i32
    %331 = arith.index_cast %330 : i32 to index
    %332 = memref.load %arg1[%331] : memref<96xi32, #tpu.memory_space<smem>>
    %c3_i32_268 = arith.constant 3 : i32
    %c0_i32_269 = arith.constant 0 : i32
    %333 = tpu.memref_slice %arg2[%332, %c0_i32_269] : memref<320x128xf32, #tpu.memory_space<any>> -> memref<1x128xf32, #tpu.memory_space<any>>
    %c3_i32_270 = arith.constant 3 : i32
    %c0_i32_271 = arith.constant 0 : i32
    %334 = tpu.memref_slice %arg4[%c3_i32_270, %c0_i32_271] : memref<4x128xf32, #tpu.memory_space<vmem>> -> memref<1x128xf32, #tpu.memory_space<vmem>>
    %335 = tpu.memref_slice %arg5[%c3_i32_268] : memref<4x!tpu.dma_semaphore, #tpu.memory_space<semaphore_mem>> -> memref<1x!tpu.dma_semaphore, #tpu.memory_space<semaphore_mem>>
    %336 = tpu.memref_squeeze %335 : memref<1x!tpu.dma_semaphore, #tpu.memory_space<semaphore_mem>> -> memref<!tpu.dma_semaphore, #tpu.memory_space<semaphore_mem>>
    tpu.enqueue_dma source(%333 : memref<1x128xf32, #tpu.memory_space<any>>) target(%334 : memref<1x128xf32, #tpu.memory_space<vmem>>) target_semaphore(%336 : memref<!tpu.dma_semaphore, #tpu.memory_space<semaphore_mem>>)
    %c0_i32_272 = arith.constant 0 : i32
    %c0_i32_273 = arith.constant 0 : i32
    %337 = tpu.memref_slice %arg2[%311, %c0_i32_273] : memref<320x128xf32, #tpu.memory_space<any>> -> memref<1x128xf32, #tpu.memory_space<any>>
    %c0_i32_274 = arith.constant 0 : i32
    %c0_i32_275 = arith.constant 0 : i32
    %338 = tpu.memref_slice %arg4[%c0_i32_274, %c0_i32_275] : memref<4x128xf32, #tpu.memory_space<vmem>> -> memref<1x128xf32, #tpu.memory_space<vmem>>
    %339 = tpu.memref_slice %arg5[%c0_i32_272] : memref<4x!tpu.dma_semaphore, #tpu.memory_space<semaphore_mem>> -> memref<1x!tpu.dma_semaphore, #tpu.memory_space<semaphore_mem>>
    %340 = tpu.memref_squeeze %339 : memref<1x!tpu.dma_semaphore, #tpu.memory_space<semaphore_mem>> -> memref<!tpu.dma_semaphore, #tpu.memory_space<semaphore_mem>>
    tpu.wait_dma2 semaphore(%340 : memref<!tpu.dma_semaphore, #tpu.memory_space<semaphore_mem>>) src(%337 : memref<1x128xf32, #tpu.memory_space<any>>) dst(%338 : memref<1x128xf32, #tpu.memory_space<vmem>>)
    %c1_i32_276 = arith.constant 1 : i32
    %c0_i32_277 = arith.constant 0 : i32
    %341 = tpu.memref_slice %arg2[%318, %c0_i32_277] : memref<320x128xf32, #tpu.memory_space<any>> -> memref<1x128xf32, #tpu.memory_space<any>>
    %c1_i32_278 = arith.constant 1 : i32
    %c0_i32_279 = arith.constant 0 : i32
    %342 = tpu.memref_slice %arg4[%c1_i32_278, %c0_i32_279] : memref<4x128xf32, #tpu.memory_space<vmem>> -> memref<1x128xf32, #tpu.memory_space<vmem>>
    %343 = tpu.memref_slice %arg5[%c1_i32_276] : memref<4x!tpu.dma_semaphore, #tpu.memory_space<semaphore_mem>> -> memref<1x!tpu.dma_semaphore, #tpu.memory_space<semaphore_mem>>
    %344 = tpu.memref_squeeze %343 : memref<1x!tpu.dma_semaphore, #tpu.memory_space<semaphore_mem>> -> memref<!tpu.dma_semaphore, #tpu.memory_space<semaphore_mem>>
    tpu.wait_dma2 semaphore(%344 : memref<!tpu.dma_semaphore, #tpu.memory_space<semaphore_mem>>) src(%341 : memref<1x128xf32, #tpu.memory_space<any>>) dst(%342 : memref<1x128xf32, #tpu.memory_space<vmem>>)
    %c2_i32_280 = arith.constant 2 : i32
    %c0_i32_281 = arith.constant 0 : i32
    %345 = tpu.memref_slice %arg2[%325, %c0_i32_281] : memref<320x128xf32, #tpu.memory_space<any>> -> memref<1x128xf32, #tpu.memory_space<any>>
    %c2_i32_282 = arith.constant 2 : i32
    %c0_i32_283 = arith.constant 0 : i32
    %346 = tpu.memref_slice %arg4[%c2_i32_282, %c0_i32_283] : memref<4x128xf32, #tpu.memory_space<vmem>> -> memref<1x128xf32, #tpu.memory_space<vmem>>
    %347 = tpu.memref_slice %arg5[%c2_i32_280] : memref<4x!tpu.dma_semaphore, #tpu.memory_space<semaphore_mem>> -> memref<1x!tpu.dma_semaphore, #tpu.memory_space<semaphore_mem>>
    %348 = tpu.memref_squeeze %347 : memref<1x!tpu.dma_semaphore, #tpu.memory_space<semaphore_mem>> -> memref<!tpu.dma_semaphore, #tpu.memory_space<semaphore_mem>>
    tpu.wait_dma2 semaphore(%348 : memref<!tpu.dma_semaphore, #tpu.memory_space<semaphore_mem>>) src(%345 : memref<1x128xf32, #tpu.memory_space<any>>) dst(%346 : memref<1x128xf32, #tpu.memory_space<vmem>>)
    %c3_i32_284 = arith.constant 3 : i32
    %c0_i32_285 = arith.constant 0 : i32
    %349 = tpu.memref_slice %arg2[%332, %c0_i32_285] : memref<320x128xf32, #tpu.memory_space<any>> -> memref<1x128xf32, #tpu.memory_space<any>>
    %c3_i32_286 = arith.constant 3 : i32
    %c0_i32_287 = arith.constant 0 : i32
    %350 = tpu.memref_slice %arg4[%c3_i32_286, %c0_i32_287] : memref<4x128xf32, #tpu.memory_space<vmem>> -> memref<1x128xf32, #tpu.memory_space<vmem>>
    %351 = tpu.memref_slice %arg5[%c3_i32_284] : memref<4x!tpu.dma_semaphore, #tpu.memory_space<semaphore_mem>> -> memref<1x!tpu.dma_semaphore, #tpu.memory_space<semaphore_mem>>
    %352 = tpu.memref_squeeze %351 : memref<1x!tpu.dma_semaphore, #tpu.memory_space<semaphore_mem>> -> memref<!tpu.dma_semaphore, #tpu.memory_space<semaphore_mem>>
    tpu.wait_dma2 semaphore(%352 : memref<!tpu.dma_semaphore, #tpu.memory_space<semaphore_mem>>) src(%349 : memref<1x128xf32, #tpu.memory_space<any>>) dst(%350 : memref<1x128xf32, #tpu.memory_space<vmem>>)
    %c0_288 = arith.constant 0 : index
    %c0_289 = arith.constant 0 : index
    %353 = vector.load %arg4[%c0_288, %c0_289] : memref<4x128xf32, #tpu.memory_space<vmem>>, vector<4x128xf32>
    %cst_290 = arith.constant dense<0.000000e+00> : vector<128xf32>
    %354 = vector.multi_reduction <add>, %353, %cst_290 [0] : vector<4x128xf32> to vector<128xf32>
    %355 = vector.shape_cast %354 : vector<128xf32> to vector<1x128xf32>
    %c6 = arith.constant 6 : index
    %c0_291 = arith.constant 0 : index
    %356 = vector.load %arg3[%c6, %c0_291] : memref<8x128xf32, #tpu.memory_space<vmem>>, vector<1x128xf32>
    tpu.vector_store %arg3[%c6, %c0_291], %355 {strides = array<i32>} : memref<8x128xf32, #tpu.memory_space<vmem>>, vector<1x128xf32>,
    %c8_i32_292 = arith.constant 8 : i32
    %357 = arith.muli %arg0, %c8_i32_292 : i32
    %c7_i32 = arith.constant 7 : i32
    %358 = arith.addi %357, %c7_i32 : i32
    %c4_i32_293 = arith.constant 4 : i32
    %359 = arith.muli %358, %c4_i32_293 : i32
    %c0_i32_294 = arith.constant 0 : i32
    %360 = arith.addi %359, %c0_i32_294 : i32
    %361 = arith.index_cast %360 : i32 to index
    %362 = memref.load %arg1[%361] : memref<96xi32, #tpu.memory_space<smem>>
    %c0_i32_295 = arith.constant 0 : i32
    %c0_i32_296 = arith.constant 0 : i32
    %363 = tpu.memref_slice %arg2[%362, %c0_i32_296] : memref<320x128xf32, #tpu.memory_space<any>> -> memref<1x128xf32, #tpu.memory_space<any>>
    %c0_i32_297 = arith.constant 0 : i32
    %c0_i32_298 = arith.constant 0 : i32
    %364 = tpu.memref_slice %arg4[%c0_i32_297, %c0_i32_298] : memref<4x128xf32, #tpu.memory_space<vmem>> -> memref<1x128xf32, #tpu.memory_space<vmem>>
    %365 = tpu.memref_slice %arg5[%c0_i32_295] : memref<4x!tpu.dma_semaphore, #tpu.memory_space<semaphore_mem>> -> memref<1x!tpu.dma_semaphore, #tpu.memory_space<semaphore_mem>>
    %366 = tpu.memref_squeeze %365 : memref<1x!tpu.dma_semaphore, #tpu.memory_space<semaphore_mem>> -> memref<!tpu.dma_semaphore, #tpu.memory_space<semaphore_mem>>
    tpu.enqueue_dma source(%363 : memref<1x128xf32, #tpu.memory_space<any>>) target(%364 : memref<1x128xf32, #tpu.memory_space<vmem>>) target_semaphore(%366 : memref<!tpu.dma_semaphore, #tpu.memory_space<semaphore_mem>>)
    %c1_i32_299 = arith.constant 1 : i32
    %367 = arith.addi %359, %c1_i32_299 : i32
    %368 = arith.index_cast %367 : i32 to index
    %369 = memref.load %arg1[%368] : memref<96xi32, #tpu.memory_space<smem>>
    %c1_i32_300 = arith.constant 1 : i32
    %c0_i32_301 = arith.constant 0 : i32
    %370 = tpu.memref_slice %arg2[%369, %c0_i32_301] : memref<320x128xf32, #tpu.memory_space<any>> -> memref<1x128xf32, #tpu.memory_space<any>>
    %c1_i32_302 = arith.constant 1 : i32
    %c0_i32_303 = arith.constant 0 : i32
    %371 = tpu.memref_slice %arg4[%c1_i32_302, %c0_i32_303] : memref<4x128xf32, #tpu.memory_space<vmem>> -> memref<1x128xf32, #tpu.memory_space<vmem>>
    %372 = tpu.memref_slice %arg5[%c1_i32_300] : memref<4x!tpu.dma_semaphore, #tpu.memory_space<semaphore_mem>> -> memref<1x!tpu.dma_semaphore, #tpu.memory_space<semaphore_mem>>
    %373 = tpu.memref_squeeze %372 : memref<1x!tpu.dma_semaphore, #tpu.memory_space<semaphore_mem>> -> memref<!tpu.dma_semaphore, #tpu.memory_space<semaphore_mem>>
    tpu.enqueue_dma source(%370 : memref<1x128xf32, #tpu.memory_space<any>>) target(%371 : memref<1x128xf32, #tpu.memory_space<vmem>>) target_semaphore(%373 : memref<!tpu.dma_semaphore, #tpu.memory_space<semaphore_mem>>)
    %c2_i32_304 = arith.constant 2 : i32
    %374 = arith.addi %359, %c2_i32_304 : i32
    %375 = arith.index_cast %374 : i32 to index
    %376 = memref.load %arg1[%375] : memref<96xi32, #tpu.memory_space<smem>>
    %c2_i32_305 = arith.constant 2 : i32
    %c0_i32_306 = arith.constant 0 : i32
    %377 = tpu.memref_slice %arg2[%376, %c0_i32_306] : memref<320x128xf32, #tpu.memory_space<any>> -> memref<1x128xf32, #tpu.memory_space<any>>
    %c2_i32_307 = arith.constant 2 : i32
    %c0_i32_308 = arith.constant 0 : i32
    %378 = tpu.memref_slice %arg4[%c2_i32_307, %c0_i32_308] : memref<4x128xf32, #tpu.memory_space<vmem>> -> memref<1x128xf32, #tpu.memory_space<vmem>>
    %379 = tpu.memref_slice %arg5[%c2_i32_305] : memref<4x!tpu.dma_semaphore, #tpu.memory_space<semaphore_mem>> -> memref<1x!tpu.dma_semaphore, #tpu.memory_space<semaphore_mem>>
    %380 = tpu.memref_squeeze %379 : memref<1x!tpu.dma_semaphore, #tpu.memory_space<semaphore_mem>> -> memref<!tpu.dma_semaphore, #tpu.memory_space<semaphore_mem>>
    tpu.enqueue_dma source(%377 : memref<1x128xf32, #tpu.memory_space<any>>) target(%378 : memref<1x128xf32, #tpu.memory_space<vmem>>) target_semaphore(%380 : memref<!tpu.dma_semaphore, #tpu.memory_space<semaphore_mem>>)
    %c3_i32_309 = arith.constant 3 : i32
    %381 = arith.addi %359, %c3_i32_309 : i32
    %382 = arith.index_cast %381 : i32 to index
    %383 = memref.load %arg1[%382] : memref<96xi32, #tpu.memory_space<smem>>
    %c3_i32_310 = arith.constant 3 : i32
    %c0_i32_311 = arith.constant 0 : i32
    %384 = tpu.memref_slice %arg2[%383, %c0_i32_311] : memref<320x128xf32, #tpu.memory_space<any>> -> memref<1x128xf32, #tpu.memory_space<any>>
    %c3_i32_312 = arith.constant 3 : i32
    %c0_i32_313 = arith.constant 0 : i32
    %385 = tpu.memref_slice %arg4[%c3_i32_312, %c0_i32_313] : memref<4x128xf32, #tpu.memory_space<vmem>> -> memref<1x128xf32, #tpu.memory_space<vmem>>
    %386 = tpu.memref_slice %arg5[%c3_i32_310] : memref<4x!tpu.dma_semaphore, #tpu.memory_space<semaphore_mem>> -> memref<1x!tpu.dma_semaphore, #tpu.memory_space<semaphore_mem>>
    %387 = tpu.memref_squeeze %386 : memref<1x!tpu.dma_semaphore, #tpu.memory_space<semaphore_mem>> -> memref<!tpu.dma_semaphore, #tpu.memory_space<semaphore_mem>>
    tpu.enqueue_dma source(%384 : memref<1x128xf32, #tpu.memory_space<any>>) target(%385 : memref<1x128xf32, #tpu.memory_space<vmem>>) target_semaphore(%387 : memref<!tpu.dma_semaphore, #tpu.memory_space<semaphore_mem>>)
    %c0_i32_314 = arith.constant 0 : i32
    %c0_i32_315 = arith.constant 0 : i32
    %388 = tpu.memref_slice %arg2[%362, %c0_i32_315] : memref<320x128xf32, #tpu.memory_space<any>> -> memref<1x128xf32, #tpu.memory_space<any>>
    %c0_i32_316 = arith.constant 0 : i32
    %c0_i32_317 = arith.constant 0 : i32
    %389 = tpu.memref_slice %arg4[%c0_i32_316, %c0_i32_317] : memref<4x128xf32, #tpu.memory_space<vmem>> -> memref<1x128xf32, #tpu.memory_space<vmem>>
    %390 = tpu.memref_slice %arg5[%c0_i32_314] : memref<4x!tpu.dma_semaphore, #tpu.memory_space<semaphore_mem>> -> memref<1x!tpu.dma_semaphore, #tpu.memory_space<semaphore_mem>>
    %391 = tpu.memref_squeeze %390 : memref<1x!tpu.dma_semaphore, #tpu.memory_space<semaphore_mem>> -> memref<!tpu.dma_semaphore, #tpu.memory_space<semaphore_mem>>
    tpu.wait_dma2 semaphore(%391 : memref<!tpu.dma_semaphore, #tpu.memory_space<semaphore_mem>>) src(%388 : memref<1x128xf32, #tpu.memory_space<any>>) dst(%389 : memref<1x128xf32, #tpu.memory_space<vmem>>)
    %c1_i32_318 = arith.constant 1 : i32
    %c0_i32_319 = arith.constant 0 : i32
    %392 = tpu.memref_slice %arg2[%369, %c0_i32_319] : memref<320x128xf32, #tpu.memory_space<any>> -> memref<1x128xf32, #tpu.memory_space<any>>
    %c1_i32_320 = arith.constant 1 : i32
    %c0_i32_321 = arith.constant 0 : i32
    %393 = tpu.memref_slice %arg4[%c1_i32_320, %c0_i32_321] : memref<4x128xf32, #tpu.memory_space<vmem>> -> memref<1x128xf32, #tpu.memory_space<vmem>>
    %394 = tpu.memref_slice %arg5[%c1_i32_318] : memref<4x!tpu.dma_semaphore, #tpu.memory_space<semaphore_mem>> -> memref<1x!tpu.dma_semaphore, #tpu.memory_space<semaphore_mem>>
    %395 = tpu.memref_squeeze %394 : memref<1x!tpu.dma_semaphore, #tpu.memory_space<semaphore_mem>> -> memref<!tpu.dma_semaphore, #tpu.memory_space<semaphore_mem>>
    tpu.wait_dma2 semaphore(%395 : memref<!tpu.dma_semaphore, #tpu.memory_space<semaphore_mem>>) src(%392 : memref<1x128xf32, #tpu.memory_space<any>>) dst(%393 : memref<1x128xf32, #tpu.memory_space<vmem>>)
    %c2_i32_322 = arith.constant 2 : i32
    %c0_i32_323 = arith.constant 0 : i32
    %396 = tpu.memref_slice %arg2[%376, %c0_i32_323] : memref<320x128xf32, #tpu.memory_space<any>> -> memref<1x128xf32, #tpu.memory_space<any>>
    %c2_i32_324 = arith.constant 2 : i32
    %c0_i32_325 = arith.constant 0 : i32
    %397 = tpu.memref_slice %arg4[%c2_i32_324, %c0_i32_325] : memref<4x128xf32, #tpu.memory_space<vmem>> -> memref<1x128xf32, #tpu.memory_space<vmem>>
    %398 = tpu.memref_slice %arg5[%c2_i32_322] : memref<4x!tpu.dma_semaphore, #tpu.memory_space<semaphore_mem>> -> memref<1x!tpu.dma_semaphore, #tpu.memory_space<semaphore_mem>>
    %399 = tpu.memref_squeeze %398 : memref<1x!tpu.dma_semaphore, #tpu.memory_space<semaphore_mem>> -> memref<!tpu.dma_semaphore, #tpu.memory_space<semaphore_mem>>
    tpu.wait_dma2 semaphore(%399 : memref<!tpu.dma_semaphore, #tpu.memory_space<semaphore_mem>>) src(%396 : memref<1x128xf32, #tpu.memory_space<any>>) dst(%397 : memref<1x128xf32, #tpu.memory_space<vmem>>)
    %c3_i32_326 = arith.constant 3 : i32
    %c0_i32_327 = arith.constant 0 : i32
    %400 = tpu.memref_slice %arg2[%383, %c0_i32_327] : memref<320x128xf32, #tpu.memory_space<any>> -> memref<1x128xf32, #tpu.memory_space<any>>
    %c3_i32_328 = arith.constant 3 : i32
    %c0_i32_329 = arith.constant 0 : i32
    %401 = tpu.memref_slice %arg4[%c3_i32_328, %c0_i32_329] : memref<4x128xf32, #tpu.memory_space<vmem>> -> memref<1x128xf32, #tpu.memory_space<vmem>>
    %402 = tpu.memref_slice %arg5[%c3_i32_326] : memref<4x!tpu.dma_semaphore, #tpu.memory_space<semaphore_mem>> -> memref<1x!tpu.dma_semaphore, #tpu.memory_space<semaphore_mem>>
    %403 = tpu.memref_squeeze %402 : memref<1x!tpu.dma_semaphore, #tpu.memory_space<semaphore_mem>> -> memref<!tpu.dma_semaphore, #tpu.memory_space<semaphore_mem>>
    tpu.wait_dma2 semaphore(%403 : memref<!tpu.dma_semaphore, #tpu.memory_space<semaphore_mem>>) src(%400 : memref<1x128xf32, #tpu.memory_space<any>>) dst(%401 : memref<1x128xf32, #tpu.memory_space<vmem>>)
    %c0_330 = arith.constant 0 : index
    %c0_331 = arith.constant 0 : index
    %404 = vector.load %arg4[%c0_330, %c0_331] : memref<4x128xf32, #tpu.memory_space<vmem>>, vector<4x128xf32>
    %cst_332 = arith.constant dense<0.000000e+00> : vector<128xf32>
    %405 = vector.multi_reduction <add>, %404, %cst_332 [0] : vector<4x128xf32> to vector<128xf32>
    %406 = vector.shape_cast %405 : vector<128xf32> to vector<1x128xf32>
    %c7 = arith.constant 7 : index
    %c0_333 = arith.constant 0 : index
    %407 = vector.load %arg3[%c7, %c0_333] : memref<8x128xf32, #tpu.memory_space<vmem>>, vector<1x128xf32>
    tpu.vector_store %arg3[%c7, %c0_333], %406 {strides = array<i32>} : memref<8x128xf32, #tpu.memory_space<vmem>>, vector<1x128xf32>,
    return
  }
  func.func @transform_1(%arg0: i32, %arg1: memref<96xi32, #tpu.memory_space<smem>>) -> (i32, i32) {
    %c0_i32 = arith.constant 0 : i32
    %c0_i32_0 = arith.constant 0 : i32
    return %arg0, %c0_i32 : i32, i32
  }
}

</mosaic_0001>

<llo_original>
// kernel: tpu_custom_call.1
$region0: #{tpu_custom_call.1}
  #allocation0 [shape = 'u32[]', space=smem, size = 0x4, offset = 0x4, fixed_abs, tag = 'smem constant byte address 0x4 - core index']
  #allocation1 [shape = 'u32[144,128]{1,0:T(1,128)}', space=vmem, size = 0x12000, scoped, tag = 'internal scratch']
  #allocation2 [shape = 'f32[4,128]{1,0:T(4,128)}', space=vmem, size = 0x800, scoped, tag = 'scratch operand']
  #allocation3 [shape = 's32[4]{0}', space=sflag, size = 0x10, scoped, tag = 'scratch operand']
  #allocation4 [shape = 's32[1]{0}', space=sflag, size = 0x4, scoped, tag = 'scoped memory for tpu_custom_call.1']
  #allocation5 [shape = 'u8[512]{0}', space=smem, size = 0x200, scoped, tag = 'prefetched SMEM operand 0']
  #allocation8 [shape = 's32[]', space=sflag, size = 0x4, offset = 0, fixed_abs, tag = 'sflag constant byte address 0x0 - dummy sync flag']
  #allocation9 [shape = 's32[]', space=sflag, size = 0x4, offset = 0, fixed_abs, tag = 'sflag constant byte address 0x0 - dummy sync flag']
  #allocation10 [shape = 'u32[]', space=smem, size = 0x4, offset = 0x44, fixed_abs, tag = 'smem constant byte address 0x44 - assertion arg 0']
  #allocation11 [shape = 'u32[]', space=smem, size = 0x4, offset = 0x48, fixed_abs, tag = 'smem constant byte address 0x48 - assertion arg 1']
  #allocation12 [shape = 's32[]', space=sflag, size = 0x4, offset = 0, fixed_abs, tag = 'sflag constant byte address 0x0 - dummy sync flag']
  #allocation13 [shape = 's32[]', space=sflag, size = 0x4, offset = 0, fixed_abs, tag = 'sflag constant byte address 0x0 - dummy sync flag']
  #allocation14 [shape = 's32[]', space=sflag, size = 0x4, offset = 0, fixed_abs, tag = 'sflag constant byte address 0x0 - dummy sync flag']
  #allocation15 [shape = 's32[]', space=sflag, size = 0x4, offset = 0, fixed_abs, tag = 'sflag constant byte address 0x0 - dummy sync flag']
  #allocation16 [shape = 's32[]', space=sflag, size = 0x4, offset = 0, fixed_abs, tag = 'sflag constant byte address 0x0 - dummy sync flag']
  #allocation17 [shape = 's32[]', space=sflag, size = 0x4, offset = 0, fixed_abs, tag = 'sflag constant byte address 0x0 - dummy sync flag']
  #allocation18 [shape = 's32[]', space=sflag, size = 0x4, offset = 0, fixed_abs, tag = 'sflag constant byte address 0x0 - dummy sync flag']
  #allocation19 [shape = 's32[]', space=sflag, size = 0x4, offset = 0, fixed_abs, tag = 'sflag constant byte address 0x0 - dummy sync flag']
  #allocation20 [shape = 's32[]', space=sflag, size = 0x4, offset = 0, fixed_abs, tag = 'sflag constant byte address 0x0 - dummy sync flag']
  #allocation21 [shape = 's32[]', space=sflag, size = 0x4, offset = 0, fixed_abs, tag = 'sflag constant byte address 0x0 - dummy sync flag']
  #allocation22 [shape = 's32[]', space=sflag, size = 0x4, offset = 0, fixed_abs, tag = 'sflag constant byte address 0x0 - dummy sync flag']
  #allocation23 [shape = 's32[]', space=sflag, size = 0x4, offset = 0, fixed_abs, tag = 'sflag constant byte address 0x0 - dummy sync flag']
  #allocation24 [shape = 's32[]', space=sflag, size = 0x4, offset = 0, fixed_abs, tag = 'sflag constant byte address 0x0 - dummy sync flag']
  #allocation25 [shape = 's32[]', space=sflag, size = 0x4, offset = 0, fixed_abs, tag = 'sflag constant byte address 0x0 - dummy sync flag']
  #allocation26 [shape = 's32[]', space=sflag, size = 0x4, offset = 0, fixed_abs, tag = 'sflag constant byte address 0x0 - dummy sync flag']
  #allocation27 [shape = 's32[]', space=sflag, size = 0x4, offset = 0, fixed_abs, tag = 'sflag constant byte address 0x0 - dummy sync flag']
  #allocation28 [shape = 's32[]', space=sflag, size = 0x4, offset = 0, fixed_abs, tag = 'sflag constant byte address 0x0 - dummy sync flag']
  #allocation29 [shape = 's32[]', space=sflag, size = 0x4, offset = 0, fixed_abs, tag = 'sflag constant byte address 0x0 - dummy sync flag']
  #allocation30 [shape = 's32[]', space=sflag, size = 0x4, offset = 0, fixed_abs, tag = 'sflag constant byte address 0x0 - dummy sync flag']
  #allocation31 [shape = 's32[]', space=sflag, size = 0x4, offset = 0, fixed_abs, tag = 'sflag constant byte address 0x0 - dummy sync flag']
  #allocation32 [shape = 's32[]', space=sflag, size = 0x4, offset = 0, fixed_abs, tag = 'sflag constant byte address 0x0 - dummy sync flag']
  #allocation33 [shape = 's32[]', space=sflag, size = 0x4, offset = 0, fixed_abs, tag = 'sflag constant byte address 0x0 - dummy sync flag']
  #allocation34 [shape = 's32[]', space=sflag, size = 0x4, offset = 0, fixed_abs, tag = 'sflag constant byte address 0x0 - dummy sync flag']
  #allocation35 [shape = 's32[]', space=sflag, size = 0x4, offset = 0, fixed_abs, tag = 'sflag constant byte address 0x0 - dummy sync flag']
  #allocation36 [shape = 's32[]', space=sflag, size = 0x4, offset = 0, fixed_abs, tag = 'sflag constant byte address 0x0 - dummy sync flag']
  #allocation37 [shape = 's32[]', space=sflag, size = 0x4, offset = 0, fixed_abs, tag = 'sflag constant byte address 0x0 - dummy sync flag']
  #allocation38 [shape = 's32[]', space=sflag, size = 0x4, offset = 0, fixed_abs, tag = 'sflag constant byte address 0x0 - dummy sync flag']
  #allocation39 [shape = 's32[]', space=sflag, size = 0x4, offset = 0, fixed_abs, tag = 'sflag constant byte address 0x0 - dummy sync flag']
  #allocation40 [shape = 's32[]', space=sflag, size = 0x4, offset = 0, fixed_abs, tag = 'sflag constant byte address 0x0 - dummy sync flag']
  #allocation41 [shape = 's32[]', space=sflag, size = 0x4, offset = 0, fixed_abs, tag = 'sflag constant byte address 0x0 - dummy sync flag']
  #allocation42 [shape = 's32[]', space=sflag, size = 0x4, offset = 0, fixed_abs, tag = 'sflag constant byte address 0x0 - dummy sync flag']
  #allocation43 [shape = 's32[]', space=sflag, size = 0x4, offset = 0, fixed_abs, tag = 'sflag constant byte address 0x0 - dummy sync flag']
  #allocation44 [shape = 's32[]', space=sflag, size = 0x4, offset = 0, fixed_abs, tag = 'sflag constant byte address 0x0 - dummy sync flag']
  #allocation45 [shape = 's32[]', space=sflag, size = 0x4, offset = 0, fixed_abs, tag = 'sflag constant byte address 0x0 - dummy sync flag']
  #allocation46 [shape = 's32[]', space=sflag, size = 0x4, offset = 0, fixed_abs, tag = 'sflag constant byte address 0x0 - dummy sync flag']
  #allocation47 [shape = 's32[]', space=sflag, size = 0x4, offset = 0, fixed_abs, tag = 'sflag constant byte address 0x0 - dummy sync flag']
  #allocation48 [shape = 's32[]', space=sflag, size = 0x4, offset = 0, fixed_abs, tag = 'sflag constant byte address 0x0 - dummy sync flag']
  #allocation49 [shape = 's32[]', space=sflag, size = 0x4, offset = 0, fixed_abs, tag = 'sflag constant byte address 0x0 - dummy sync flag']
  #allocation50 [shape = 's32[]', space=sflag, size = 0x4, offset = 0, fixed_abs, tag = 'sflag constant byte address 0x0 - dummy sync flag']
  #allocation51 [shape = 's32[]', space=sflag, size = 0x4, offset = 0, fixed_abs, tag = 'sflag constant byte address 0x0 - dummy sync flag']
  #allocation52 [shape = 's32[]', space=sflag, size = 0x4, offset = 0, fixed_abs, tag = 'sflag constant byte address 0x0 - dummy sync flag']
  #allocation53 [shape = 's32[]', space=sflag, size = 0x4, offset = 0, fixed_abs, tag = 'sflag constant byte address 0x0 - dummy sync flag']
  #allocation54 [shape = 's32[]', space=sflag, size = 0x4, offset = 0, fixed_abs, tag = 'sflag constant byte address 0x0 - dummy sync flag']
  #allocation55 [shape = 's32[]', space=sflag, size = 0x4, offset = 0, fixed_abs, tag = 'sflag constant byte address 0x0 - dummy sync flag']
  #allocation56 [shape = 's32[]', space=sflag, size = 0x4, offset = 0, fixed_abs, tag = 'sflag constant byte address 0x0 - dummy sync flag']
  #allocation57 [shape = 's32[]', space=sflag, size = 0x4, offset = 0, fixed_abs, tag = 'sflag constant byte address 0x0 - dummy sync flag']
  #allocation58 [shape = 's32[]', space=sflag, size = 0x4, offset = 0, fixed_abs, tag = 'sflag constant byte address 0x0 - dummy sync flag']
  #allocation59 [shape = 's32[]', space=sflag, size = 0x4, offset = 0, fixed_abs, tag = 'sflag constant byte address 0x0 - dummy sync flag']
  #allocation60 [shape = 's32[]', space=sflag, size = 0x4, offset = 0, fixed_abs, tag = 'sflag constant byte address 0x0 - dummy sync flag']
  #allocation61 [shape = 's32[]', space=sflag, size = 0x4, offset = 0, fixed_abs, tag = 'sflag constant byte address 0x0 - dummy sync flag']
  #allocation62 [shape = 's32[]', space=sflag, size = 0x4, offset = 0, fixed_abs, tag = 'sflag constant byte address 0x0 - dummy sync flag']
  #allocation63 [shape = 's32[]', space=sflag, size = 0x4, offset = 0, fixed_abs, tag = 'sflag constant byte address 0x0 - dummy sync flag']
  #allocation64 [shape = 's32[]', space=sflag, size = 0x4, offset = 0, fixed_abs, tag = 'sflag constant byte address 0x0 - dummy sync flag']
  #allocation65 [shape = 's32[]', space=sflag, size = 0x4, offset = 0, fixed_abs, tag = 'sflag constant byte address 0x0 - dummy sync flag']
  #allocation66 [shape = 's32[]', space=sflag, size = 0x4, offset = 0, fixed_abs, tag = 'sflag constant byte address 0x0 - dummy sync flag']
  #allocation67 [shape = 's32[]', space=sflag, size = 0x4, offset = 0, fixed_abs, tag = 'sflag constant byte address 0x0 - dummy sync flag']
  #allocation68 [shape = 's32[]', space=sflag, size = 0x4, offset = 0, fixed_abs, tag = 'sflag constant byte address 0x0 - dummy sync flag']
  #allocation69 [shape = 's32[]', space=sflag, size = 0x4, offset = 0, fixed_abs, tag = 'sflag constant byte address 0x0 - dummy sync flag']
  #allocation70 [shape = 's32[]', space=sflag, size = 0x4, offset = 0, fixed_abs, tag = 'sflag constant byte address 0x0 - dummy sync flag']
  #allocation71 [shape = 's32[]', space=sflag, size = 0x4, offset = 0, fixed_abs, tag = 'sflag constant byte address 0x0 - dummy sync flag']
  #allocation72 [shape = 's32[]', space=sflag, size = 0x4, offset = 0, fixed_abs, tag = 'sflag constant byte address 0x0 - dummy sync flag']
  #allocation73 [shape = 's32[]', space=sflag, size = 0x4, offset = 0, fixed_abs, tag = 'sflag constant byte address 0x0 - dummy sync flag']
  %s0 = inlined_call_operand.hbm [shape: s32[96], index: 0, kind: input, shape index: {}]
  %s1 = inlined_call_operand.hbm [shape: f32[320,128], index: 1, kind: input, shape index: {}]
  %s2 = inlined_call_operand.hbm [shape: f32[24,128], index: 2, kind: output, shape index: {}]
  %s3 = sld [smem:[#allocation0]]
  $region153: #{tpu_custom_call.1} parent=0
    _
  %s5 = ssub.s32 1, %s3
  %s6 = scalar_select 0, %s5, %s3
  %8 = dma.hbm_to_smem %s0, 16, [#allocation5], [#allocation4]
  %9 = dma.done [#allocation4], 16
  %10 = sfence
  $region1: #{tpu_custom_call.1} parent=0
    #allocation6 [shape = 'u8[8192]{0}', space=vmem, size = 0x2000, scoped, tag = 'output window, operand 0']
    #allocation7 [shape = 's32[2]{0}', space=sflag, size = 0x8, scoped, tag = 'scoped memory for tpu_custom_call.1']
    %11 = vsyncpa [#allocation7], 0
    %s12 = scalar_lea.sflag [#allocation7], 1
    %13 = vsyncpa %s12, 0
    loop: start=0, step=1, limit=4
    $region2: #{tpu_custom_call.1} parent=1 // loop_pre_header
      _
    $region3: #{tpu_custom_call.1} parent=1 // loop_header
      %s15 = sphi 0, %s19
      %p16 = scmp.ge.s32.totalorder %s15, 4
      %s24 = sphi 0, %s26
      %s27 = sphi 0, %s24
      %s37 = sphi 0, %s27
    $region4: #{tpu_custom_call.1} parent=1 // loop_header_branch
      %18 = sbr.rel (%p16) target = $region8
    $region5: #{tpu_custom_call.1} parent=1 // loop_body
      %s20 = ssub.s32 %s15, 1
      %s21 = sadd.s32 %s15, 1
      %s22 = ssub.s32 %s15, %s21
      %p23 = scmp.eq.s32.totalorder %s22, 0
      %s25 = sadd.s32 %s24, 1
      %s26 = scalar_select %p23, %s24, %s25
      %p28 = pneg %p23
      %p29 = scmp.eq.s32.totalorder %s15, 2
      %p30 = por %p28, %p29
      %p31 = scmp.ne.s32.totalorder %s24, %s27
      %p32 = scmp.eq.s32.totalorder %s15, 0
      %p33 = por %p31, %p32
      %p34 = scmp.ne.s32.totalorder %s24, %s27
      %p35 = scmp.eq.s32.totalorder %s20, 2
      %p36 = por %p34, %p35
      %p38 = scmp.ne.s32.totalorder %s27, %s37
      %p39 = scmp.eq.s32.totalorder %s20, 0
      %p40 = por %p38, %p39
      %p41 = scmp.lt.s32.totalorder %s15, 3
      // Predicated region
      $region9: #{tpu_custom_call.1} parent=5 // pred_check
        %p42 = pneg %p41
      $region10: #{tpu_custom_call.1} parent=5 // pred_check_branch
        %44 = sbr.rel (%p42) target = $region12
      $region11: #{tpu_custom_call.1} parent=5 // pred_region
        %p45 = pneg %p33
        %p46 = pneg %p30
        %s47 = sand.u32 %s24, 1
        %s48 = scalar_lea.sflag [#allocation7], %s47
        %s49 = sand.u32 %s24, 1
        %s50 = smul.addr %s49, 8
        %s51 = scalar_lea.vmem [#allocation6], %s50
        %s52 = smul.u32 %s15, 32
        %s53 = sld [smem:[#allocation5 + %s52]]
        %s54 = smul.addr %s53, 16
        %s55 = scalar_lea.hbm %s1, %s54
        // Predicated region
        $region13: #{tpu_custom_call.1} parent=11 // pred_check
          _
        $region14: #{tpu_custom_call.1} parent=11 // pred_check_branch
          %57 = sbr.rel target = $region16
        $region15: #{tpu_custom_call.1} parent=11 // pred_region
          %58 = sst [smem:[#allocation10]] [#allocation9]
          %59 = sst [smem:[#allocation11]] [#allocation8]
        $region16: #{tpu_custom_call.1} parent=11 // pred_fallthru
          _
        %61 = shalt.err (0)
        %s63 = sshll.u32 [#allocation2], 4
        %s64 = int_to_ptr.vmem [resolvable:$true] %s63
        %66 = dma.hbm_to_vmem [thread:$0]  %s55, 16, %s64, [#allocation3]
        %s67 = sadd.s32 %s52, 1
        %s68 = sld [smem:[#allocation5 + %s67]]
        %s69 = smul.addr %s68, 16
        %s70 = scalar_lea.hbm %s1, %s69
        %s71 = scalar_lea.vmem [#allocation2], 1
        %s72 = scalar_lea.sflag [#allocation3], 1
        // Predicated region
        $region17: #{tpu_custom_call.1} parent=11 // pred_check
          _
        $region18: #{tpu_custom_call.1} parent=11 // pred_check_branch
          %74 = sbr.rel target = $region20
        $region19: #{tpu_custom_call.1} parent=11 // pred_region
          %75 = sst [smem:[#allocation10]] [#allocation13]
          %76 = sst [smem:[#allocation11]] [#allocation12]
        $region20: #{tpu_custom_call.1} parent=11 // pred_fallthru
          _
        %78 = shalt.err (0)
        %s80 = sshll.u32 %s71, 4
        %s81 = int_to_ptr.vmem [resolvable:$true] %s80
        %83 = dma.hbm_to_vmem [thread:$0]  %s70, 16, %s81, %s72
        %s84 = sadd.s32 %s52, 2
        %s85 = sld [smem:[#allocation5 + %s84]]
        %s86 = smul.addr %s85, 16
        %s87 = scalar_lea.hbm %s1, %s86
        %s88 = scalar_lea.vmem [#allocation2], 2
        %s89 = scalar_lea.sflag [#allocation3], 2
        // Predicated region
        $region21: #{tpu_custom_call.1} parent=11 // pred_check
          _
        $region22: #{tpu_custom_call.1} parent=11 // pred_check_branch
          %91 = sbr.rel target = $region24
        $region23: #{tpu_custom_call.1} parent=11 // pred_region
          %92 = sst [smem:[#allocation10]] [#allocation15]
          %93 = sst [smem:[#allocation11]] [#allocation14]
        $region24: #{tpu_custom_call.1} parent=11 // pred_fallthru
          _
        %95 = shalt.err (0)
        %s97 = sshll.u32 %s88, 4
        %s98 = int_to_ptr.vmem [resolvable:$true] %s97
        %100 = dma.hbm_to_vmem [thread:$0]  %s87, 16, %s98, %s89
        %s101 = sadd.s32 %s52, 3
        %s102 = sld [smem:[#allocation5 + %s101]]
        %s103 = smul.addr %s102, 16
        %s104 = scalar_lea.hbm %s1, %s103
        %s105 = scalar_lea.vmem [#allocation2], 3
        %s106 = scalar_lea.sflag [#allocation3], 3
        // Predicated region
        $region25: #{tpu_custom_call.1} parent=11 // pred_check
          _
        $region26: #{tpu_custom_call.1} parent=11 // pred_check_branch
          %108 = sbr.rel target = $region28
        $region27: #{tpu_custom_call.1} parent=11 // pred_region
          %109 = sst [smem:[#allocation10]] [#allocation17]
          %110 = sst [smem:[#allocation11]] [#allocation16]
        $region28: #{tpu_custom_call.1} parent=11 // pred_fallthru
          _
        %112 = shalt.err (0)
        %s114 = sshll.u32 %s105, 4
        %s115 = int_to_ptr.vmem [resolvable:$true] %s114
        %117 = dma.hbm_to_vmem [thread:$0]  %s104, 16, %s115, %s106
        %s118 = smul.u32 1, 1
        %s119 = sshll.u32 %s118, 4
        %120 = dma.done [#allocation3], %s119
        %s121 = sshll.u32 %s118, 4
        %122 = dma.done %s72, %s121
        %s123 = sshll.u32 %s118, 4
        %124 = dma.done %s89, %s123
        %s125 = sshll.u32 %s118, 4
        %126 = dma.done %s106, %s125
        %v127 = vld [vmem:[#allocation2] sm:$0xf]
        %vm128 = vcmask 1043456
        %v129 = vsel %vm128, %v127, 0.0
        %v130 = vrot.slane %v129, 4
        %v131 = vadd.f32 %v129, %v130
        %v132 = vrot.slane %v131, 2
        %v133 = vadd.f32 %v131, %v132
        %v134 = vrot.slane %v133, 1
        %v135 = vadd.f32 %v133, %v134
        %136 = vst [vmem:[%s51] sm:$0x1] %v135
        %s137 = smul.u32 %s15, 8
        %s138 = sadd.s32 %s137, 1
        %s139 = smul.u32 %s138, 4
        %s140 = sld [smem:[#allocation5 + %s139]]
        %s141 = smul.addr %s140, 16
        %s142 = scalar_lea.hbm %s1, %s141
        // Predicated region
        $region29: #{tpu_custom_call.1} parent=11 // pred_check
          _
        $region30: #{tpu_custom_call.1} parent=11 // pred_check_branch
          %144 = sbr.rel target = $region32
        $region31: #{tpu_custom_call.1} parent=11 // pred_region
          %145 = sst [smem:[#allocation10]] [#allocation19]
          %146 = sst [smem:[#allocation11]] [#allocation18]
        $region32: #{tpu_custom_call.1} parent=11 // pred_fallthru
          _
        %148 = shalt.err (0)
        %s150 = sshll.u32 [#allocation2], 4
        %s151 = int_to_ptr.vmem [resolvable:$true] %s150
        %153 = dma.hbm_to_vmem [thread:$0]  %s142, 16, %s151, [#allocation3]
        %s154 = sadd.s32 %s139, 1
        %s155 = sld [smem:[#allocation5 + %s154]]
        %s156 = smul.addr %s155, 16
        %s157 = scalar_lea.hbm %s1, %s156
        // Predicated region
        $region33: #{tpu_custom_call.1} parent=11 // pred_check
          _
        $region34: #{tpu_custom_call.1} parent=11 // pred_check_branch
          %159 = sbr.rel target = $region36
        $region35: #{tpu_custom_call.1} parent=11 // pred_region
          %160 = sst [smem:[#allocation10]] [#allocation21]
          %161 = sst [smem:[#allocation11]] [#allocation20]
        $region36: #{tpu_custom_call.1} parent=11 // pred_fallthru
          _
        %163 = shalt.err (0)
        %s165 = sshll.u32 %s71, 4
        %s166 = int_to_ptr.vmem [resolvable:$true] %s165
        %168 = dma.hbm_to_vmem [thread:$0]  %s157, 16, %s166, %s72
        %s169 = sadd.s32 %s139, 2
        %s170 = sld [smem:[#allocation5 + %s169]]
        %s171 = smul.addr %s170, 16
        %s172 = scalar_lea.hbm %s1, %s171
        // Predicated region
        $region37: #{tpu_custom_call.1} parent=11 // pred_check
          _
        $region38: #{tpu_custom_call.1} parent=11 // pred_check_branch
          %174 = sbr.rel target = $region40
        $region39: #{tpu_custom_call.1} parent=11 // pred_region
          %175 = sst [smem:[#allocation10]] [#allocation23]
          %176 = sst [smem:[#allocation11]] [#allocation22]
        $region40: #{tpu_custom_call.1} parent=11 // pred_fallthru
          _
        %178 = shalt.err (0)
        %s180 = sshll.u32 %s88, 4
        %s181 = int_to_ptr.vmem [resolvable:$true] %s180
        %183 = dma.hbm_to_vmem [thread:$0]  %s172, 16, %s181, %s89
        %s184 = sadd.s32 %s139, 3
        %s185 = sld [smem:[#allocation5 + %s184]]
        %s186 = smul.addr %s185, 16
        %s187 = scalar_lea.hbm %s1, %s186
        // Predicated region
        $region41: #{tpu_custom_call.1} parent=11 // pred_check
          _
        $region42: #{tpu_custom_call.1} parent=11 // pred_check_branch
          %189 = sbr.rel target = $region44
        $region43: #{tpu_custom_call.1} parent=11 // pred_region
          %190 = sst [smem:[#allocation10]] [#allocation25]
          %191 = sst [smem:[#allocation11]] [#allocation24]
        $region44: #{tpu_custom_call.1} parent=11 // pred_fallthru
          _
        %193 = shalt.err (0)
        %s195 = sshll.u32 %s105, 4
        %s196 = int_to_ptr.vmem [resolvable:$true] %s195
        %198 = dma.hbm_to_vmem [thread:$0]  %s187, 16, %s196, %s106
        %s199 = sshll.u32 %s118, 4
        %200 = dma.done [#allocation3], %s199
        %s201 = sshll.u32 %s118, 4
        %202 = dma.done %s72, %s201
        %s203 = sshll.u32 %s118, 4
        %204 = dma.done %s89, %s203
        %s205 = sshll.u32 %s118, 4
        %206 = dma.done %s106, %s205
        %v207 = vld [vmem:[#allocation2] sm:$0xf]
        %v208 = vsel %vm128, %v207, 0.0
        %v209 = vrot.slane %v208, 4
        %v210 = vadd.f32 %v208, %v209
        %v211 = vrot.slane %v210, 2
        %v212 = vadd.f32 %v210, %v211
        %v213 = vrot.slane %v212, 1
        %v214 = vadd.f32 %v212, %v213
        %215 = vst [vmem:[%s51 + $0x1] sm:$0x1] %v214
        %s216 = sadd.s32 %s137, 2
        %s217 = smul.u32 %s216, 4
        %s218 = sld [smem:[#allocation5 + %s217]]
        %s219 = smul.addr %s218, 16
        %s220 = scalar_lea.hbm %s1, %s219
        // Predicated region
        $region45: #{tpu_custom_call.1} parent=11 // pred_check
          _
        $region46: #{tpu_custom_call.1} parent=11 // pred_check_branch
          %222 = sbr.rel target = $region48
        $region47: #{tpu_custom_call.1} parent=11 // pred_region
          %223 = sst [smem:[#allocation10]] [#allocation27]
          %224 = sst [smem:[#allocation11]] [#allocation26]
        $region48: #{tpu_custom_call.1} parent=11 // pred_fallthru
          _
        %226 = shalt.err (0)
        %s228 = sshll.u32 [#allocation2], 4
        %s229 = int_to_ptr.vmem [resolvable:$true] %s228
        %231 = dma.hbm_to_vmem [thread:$0]  %s220, 16, %s229, [#allocation3]
        %s232 = sadd.s32 %s217, 1
        %s233 = sld [smem:[#allocation5 + %s232]]
        %s234 = smul.addr %s233, 16
        %s235 = scalar_lea.hbm %s1, %s234
        // Predicated region
        $region49: #{tpu_custom_call.1} parent=11 // pred_check
          _
        $region50: #{tpu_custom_call.1} parent=11 // pred_check_branch
          %237 = sbr.rel target = $region52
        $region51: #{tpu_custom_call.1} parent=11 // pred_region
          %238 = sst [smem:[#allocation10]] [#allocation29]
          %239 = sst [smem:[#allocation11]] [#allocation28]
        $region52: #{tpu_custom_call.1} parent=11 // pred_fallthru
          _
        %241 = shalt.err (0)
        %s243 = sshll.u32 %s71, 4
        %s244 = int_to_ptr.vmem [resolvable:$true] %s243
        %246 = dma.hbm_to_vmem [thread:$0]  %s235, 16, %s244, %s72
        %s247 = sadd.s32 %s217, 2
        %s248 = sld [smem:[#allocation5 + %s247]]
        %s249 = smul.addr %s248, 16
        %s250 = scalar_lea.hbm %s1, %s249
        // Predicated region
        $region53: #{tpu_custom_call.1} parent=11 // pred_check
          _
        $region54: #{tpu_custom_call.1} parent=11 // pred_check_branch
          %252 = sbr.rel target = $region56
        $region55: #{tpu_custom_call.1} parent=11 // pred_region
          %253 = sst [smem:[#allocation10]] [#allocation31]
          %254 = sst [smem:[#allocation11]] [#allocation30]
        $region56: #{tpu_custom_call.1} parent=11 // pred_fallthru
          _
        %256 = shalt.err (0)
        %s258 = sshll.u32 %s88, 4
        %s259 = int_to_ptr.vmem [resolvable:$true] %s258
        %261 = dma.hbm_to_vmem [thread:$0]  %s250, 16, %s259, %s89
        %s262 = sadd.s32 %s217, 3
        %s263 = sld [smem:[#allocation5 + %s262]]
        %s264 = smul.addr %s263, 16
        %s265 = scalar_lea.hbm %s1, %s264
        // Predicated region
        $region57: #{tpu_custom_call.1} parent=11 // pred_check
          _
        $region58: #{tpu_custom_call.1} parent=11 // pred_check_branch
          %267 = sbr.rel target = $region60
        $region59: #{tpu_custom_call.1} parent=11 // pred_region
          %268 = sst [smem:[#allocation10]] [#allocation33]
          %269 = sst [smem:[#allocation11]] [#allocation32]
        $region60: #{tpu_custom_call.1} parent=11 // pred_fallthru
          _
        %271 = shalt.err (0)
        %s273 = sshll.u32 %s105, 4
        %s274 = int_to_ptr.vmem [resolvable:$true] %s273
        %276 = dma.hbm_to_vmem [thread:$0]  %s265, 16, %s274, %s106
        %s277 = sshll.u32 %s118, 4
        %278 = dma.done [#allocation3], %s277
        %s279 = sshll.u32 %s118, 4
        %280 = dma.done %s72, %s279
        %s281 = sshll.u32 %s118, 4
        %282 = dma.done %s89, %s281
        %s283 = sshll.u32 %s118, 4
        %284 = dma.done %s106, %s283
        %v285 = vld [vmem:[#allocation2] sm:$0xf]
        %v286 = vsel %vm128, %v285, 0.0
        %v287 = vrot.slane %v286, 4
        %v288 = vadd.f32 %v286, %v287
        %v289 = vrot.slane %v288, 2
        %v290 = vadd.f32 %v288, %v289
        %v291 = vrot.slane %v290, 1
        %v292 = vadd.f32 %v290, %v291
        %293 = vst [vmem:[%s51 + $0x2] sm:$0x1] %v292
        %s294 = sadd.s32 %s137, 3
        %s295 = smul.u32 %s294, 4
        %s296 = sld [smem:[#allocation5 + %s295]]
        %s297 = smul.addr %s296, 16
        %s298 = scalar_lea.hbm %s1, %s297
        // Predicated region
        $region61: #{tpu_custom_call.1} parent=11 // pred_check
          _
        $region62: #{tpu_custom_call.1} parent=11 // pred_check_branch
          %300 = sbr.rel target = $region64
        $region63: #{tpu_custom_call.1} parent=11 // pred_region
          %301 = sst [smem:[#allocation10]] [#allocation35]
          %302 = sst [smem:[#allocation11]] [#allocation34]
        $region64: #{tpu_custom_call.1} parent=11 // pred_fallthru
          _
        %304 = shalt.err (0)
        %s306 = sshll.u32 [#allocation2], 4
        %s307 = int_to_ptr.vmem [resolvable:$true] %s306
        %309 = dma.hbm_to_vmem [thread:$0]  %s298, 16, %s307, [#allocation3]
        %s310 = sadd.s32 %s295, 1
        %s311 = sld [smem:[#allocation5 + %s310]]
        %s312 = smul.addr %s311, 16
        %s313 = scalar_lea.hbm %s1, %s312
        // Predicated region
        $region65: #{tpu_custom_call.1} parent=11 // pred_check
          _
        $region66: #{tpu_custom_call.1} parent=11 // pred_check_branch
          %315 = sbr.rel target = $region68
        $region67: #{tpu_custom_call.1} parent=11 // pred_region
          %316 = sst [smem:[#allocation10]] [#allocation37]
          %317 = sst [smem:[#allocation11]] [#allocation36]
        $region68: #{tpu_custom_call.1} parent=11 // pred_fallthru
          _
        %319 = shalt.err (0)
        %s321 = sshll.u32 %s71, 4
        %s322 = int_to_ptr.vmem [resolvable:$true] %s321
        %324 = dma.hbm_to_vmem [thread:$0]  %s313, 16, %s322, %s72
        %s325 = sadd.s32 %s295, 2
        %s326 = sld [smem:[#allocation5 + %s325]]
        %s327 = smul.addr %s326, 16
        %s328 = scalar_lea.hbm %s1, %s327
        // Predicated region
        $region69: #{tpu_custom_call.1} parent=11 // pred_check
          _
        $region70: #{tpu_custom_call.1} parent=11 // pred_check_branch
          %330 = sbr.rel target = $region72
        $region71: #{tpu_custom_call.1} parent=11 // pred_region
          %331 = sst [smem:[#allocation10]] [#allocation39]
          %332 = sst [smem:[#allocation11]] [#allocation38]
        $region72: #{tpu_custom_call.1} parent=11 // pred_fallthru
          _
        %334 = shalt.err (0)
        %s336 = sshll.u32 %s88, 4
        %s337 = int_to_ptr.vmem [resolvable:$true] %s336
        %339 = dma.hbm_to_vmem [thread:$0]  %s328, 16, %s337, %s89
        %s340 = sadd.s32 %s295, 3
        %s341 = sld [smem:[#allocation5 + %s340]]
        %s342 = smul.addr %s341, 16
        %s343 = scalar_lea.hbm %s1, %s342
        // Predicated region
        $region73: #{tpu_custom_call.1} parent=11 // pred_check
          _
        $region74: #{tpu_custom_call.1} parent=11 // pred_check_branch
          %345 = sbr.rel target = $region76
        $region75: #{tpu_custom_call.1} parent=11 // pred_region
          %346 = sst [smem:[#allocation10]] [#allocation41]
          %347 = sst [smem:[#allocation11]] [#allocation40]
        $region76: #{tpu_custom_call.1} parent=11 // pred_fallthru
          _
        %349 = shalt.err (0)
        %s351 = sshll.u32 %s105, 4
        %s352 = int_to_ptr.vmem [resolvable:$true] %s351
        %354 = dma.hbm_to_vmem [thread:$0]  %s343, 16, %s352, %s106
        %s355 = sshll.u32 %s118, 4
        %356 = dma.done [#allocation3], %s355
        %s357 = sshll.u32 %s118, 4
        %358 = dma.done %s72, %s357
        %s359 = sshll.u32 %s118, 4
        %360 = dma.done %s89, %s359
        %s361 = sshll.u32 %s118, 4
        %362 = dma.done %s106, %s361
        %v363 = vld [vmem:[#allocation2] sm:$0xf]
        %v364 = vsel %vm128, %v363, 0.0
        %v365 = vrot.slane %v364, 4
        %v366 = vadd.f32 %v364, %v365
        %v367 = vrot.slane %v366, 2
        %v368 = vadd.f32 %v366, %v367
        %v369 = vrot.slane %v368, 1
        %v370 = vadd.f32 %v368, %v369
        %371 = vst [vmem:[%s51 + $0x3] sm:$0x1] %v370
        %s372 = sadd.s32 %s137, 4
        %s373 = smul.u32 %s372, 4
        %s374 = sld [smem:[#allocation5 + %s373]]
        %s375 = smul.addr %s374, 16
        %s376 = scalar_lea.hbm %s1, %s375
        // Predicated region
        $region77: #{tpu_custom_call.1} parent=11 // pred_check
          _
        $region78: #{tpu_custom_call.1} parent=11 // pred_check_branch
          %378 = sbr.rel target = $region80
        $region79: #{tpu_custom_call.1} parent=11 // pred_region
          %379 = sst [smem:[#allocation10]] [#allocation43]
          %380 = sst [smem:[#allocation11]] [#allocation42]
        $region80: #{tpu_custom_call.1} parent=11 // pred_fallthru
          _
        %382 = shalt.err (0)
        %s384 = sshll.u32 [#allocation2], 4
        %s385 = int_to_ptr.vmem [resolvable:$true] %s384
        %387 = dma.hbm_to_vmem [thread:$0]  %s376, 16, %s385, [#allocation3]
        %s388 = sadd.s32 %s373, 1
        %s389 = sld [smem:[#allocation5 + %s388]]
        %s390 = smul.addr %s389, 16
        %s391 = scalar_lea.hbm %s1, %s390
        // Predicated region
        $region81: #{tpu_custom_call.1} parent=11 // pred_check
          _
        $region82: #{tpu_custom_call.1} parent=11 // pred_check_branch
          %393 = sbr.rel target = $region84
        $region83: #{tpu_custom_call.1} parent=11 // pred_region
          %394 = sst [smem:[#allocation10]] [#allocation45]
          %395 = sst [smem:[#allocation11]] [#allocation44]
        $region84: #{tpu_custom_call.1} parent=11 // pred_fallthru
          _
        %397 = shalt.err (0)
        %s399 = sshll.u32 %s71, 4
        %s400 = int_to_ptr.vmem [resolvable:$true] %s399
        %402 = dma.hbm_to_vmem [thread:$0]  %s391, 16, %s400, %s72
        %s403 = sadd.s32 %s373, 2
        %s404 = sld [smem:[#allocation5 + %s403]]
        %s405 = smul.addr %s404, 16
        %s406 = scalar_lea.hbm %s1, %s405
        // Predicated region
        $region85: #{tpu_custom_call.1} parent=11 // pred_check
          _
        $region86: #{tpu_custom_call.1} parent=11 // pred_check_branch
          %408 = sbr.rel target = $region88
        $region87: #{tpu_custom_call.1} parent=11 // pred_region
          %409 = sst [smem:[#allocation10]] [#allocation47]
          %410 = sst [smem:[#allocation11]] [#allocation46]
        $region88: #{tpu_custom_call.1} parent=11 // pred_fallthru
          _
        %412 = shalt.err (0)
        %s414 = sshll.u32 %s88, 4
        %s415 = int_to_ptr.vmem [resolvable:$true] %s414
        %417 = dma.hbm_to_vmem [thread:$0]  %s406, 16, %s415, %s89
        %s418 = sadd.s32 %s373, 3
        %s419 = sld [smem:[#allocation5 + %s418]]
        %s420 = smul.addr %s419, 16
        %s421 = scalar_lea.hbm %s1, %s420
        // Predicated region
        $region89: #{tpu_custom_call.1} parent=11 // pred_check
          _
        $region90: #{tpu_custom_call.1} parent=11 // pred_check_branch
          %423 = sbr.rel target = $region92
        $region91: #{tpu_custom_call.1} parent=11 // pred_region
          %424 = sst [smem:[#allocation10]] [#allocation49]
          %425 = sst [smem:[#allocation11]] [#allocation48]
        $region92: #{tpu_custom_call.1} parent=11 // pred_fallthru
          _
        %427 = shalt.err (0)
        %s429 = sshll.u32 %s105, 4
        %s430 = int_to_ptr.vmem [resolvable:$true] %s429
        %432 = dma.hbm_to_vmem [thread:$0]  %s421, 16, %s430, %s106
        %s433 = sshll.u32 %s118, 4
        %434 = dma.done [#allocation3], %s433
        %s435 = sshll.u32 %s118, 4
        %436 = dma.done %s72, %s435
        %s437 = sshll.u32 %s118, 4
        %438 = dma.done %s89, %s437
        %s439 = sshll.u32 %s118, 4
        %440 = dma.done %s106, %s439
        %v441 = vld [vmem:[#allocation2] sm:$0xf]
        %v442 = vsel %vm128, %v441, 0.0
        %v443 = vrot.slane %v442, 4
        %v444 = vadd.f32 %v442, %v443
        %v445 = vrot.slane %v444, 2
        %v446 = vadd.f32 %v444, %v445
        %v447 = vrot.slane %v446, 1
        %v448 = vadd.f32 %v446, %v447
        %449 = vst [vmem:[%s51 + $0x4] sm:$0x1] %v448
        %s450 = sadd.s32 %s137, 5
        %s451 = smul.u32 %s450, 4
        %s452 = sld [smem:[#allocation5 + %s451]]
        %s453 = smul.addr %s452, 16
        %s454 = scalar_lea.hbm %s1, %s453
        // Predicated region
        $region93: #{tpu_custom_call.1} parent=11 // pred_check
          _
        $region94: #{tpu_custom_call.1} parent=11 // pred_check_branch
          %456 = sbr.rel target = $region96
        $region95: #{tpu_custom_call.1} parent=11 // pred_region
          %457 = sst [smem:[#allocation10]] [#allocation51]
          %458 = sst [smem:[#allocation11]] [#allocation50]
        $region96: #{tpu_custom_call.1} parent=11 // pred_fallthru
          _
        %460 = shalt.err (0)
        %s462 = sshll.u32 [#allocation2], 4
        %s463 = int_to_ptr.vmem [resolvable:$true] %s462
        %465 = dma.hbm_to_vmem [thread:$0]  %s454, 16, %s463, [#allocation3]
        %s466 = sadd.s32 %s451, 1
        %s467 = sld [smem:[#allocation5 + %s466]]
        %s468 = smul.addr %s467, 16
        %s469 = scalar_lea.hbm %s1, %s468
        // Predicated region
        $region97: #{tpu_custom_call.1} parent=11 // pred_check
          _
        $region98: #{tpu_custom_call.1} parent=11 // pred_check_branch
          %471 = sbr.rel target = $region100
        $region99: #{tpu_custom_call.1} parent=11 // pred_region
          %472 = sst [smem:[#allocation10]] [#allocation53]
          %473 = sst [smem:[#allocation11]] [#allocation52]
        $region100: #{tpu_custom_call.1} parent=11 // pred_fallthru
          _
        %475 = shalt.err (0)
        %s477 = sshll.u32 %s71, 4
        %s478 = int_to_ptr.vmem [resolvable:$true] %s477
        %480 = dma.hbm_to_vmem [thread:$0]  %s469, 16, %s478, %s72
        %s481 = sadd.s32 %s451, 2
        %s482 = sld [smem:[#allocation5 + %s481]]
        %s483 = smul.addr %s482, 16
        %s484 = scalar_lea.hbm %s1, %s483
        // Predicated region
        $region101: #{tpu_custom_call.1} parent=11 // pred_check
          _
        $region102: #{tpu_custom_call.1} parent=11 // pred_check_branch
          %486 = sbr.rel target = $region104
        $region103: #{tpu_custom_call.1} parent=11 // pred_region
          %487 = sst [smem:[#allocation10]] [#allocation55]
          %488 = sst [smem:[#allocation11]] [#allocation54]
        $region104: #{tpu_custom_call.1} parent=11 // pred_fallthru
          _
        %490 = shalt.err (0)
        %s492 = sshll.u32 %s88, 4
        %s493 = int_to_ptr.vmem [resolvable:$true] %s492
        %495 = dma.hbm_to_vmem [thread:$0]  %s484, 16, %s493, %s89
        %s496 = sadd.s32 %s451, 3
        %s497 = sld [smem:[#allocation5 + %s496]]
        %s498 = smul.addr %s497, 16
        %s499 = scalar_lea.hbm %s1, %s498
        // Predicated region
        $region105: #{tpu_custom_call.1} parent=11 // pred_check
          _
        $region106: #{tpu_custom_call.1} parent=11 // pred_check_branch
          %501 = sbr.rel target = $region108
        $region107: #{tpu_custom_call.1} parent=11 // pred_region
          %502 = sst [smem:[#allocation10]] [#allocation57]
          %503 = sst [smem:[#allocation11]] [#allocation56]
        $region108: #{tpu_custom_call.1} parent=11 // pred_fallthru
          _
        %505 = shalt.err (0)
        %s507 = sshll.u32 %s105, 4
        %s508 = int_to_ptr.vmem [resolvable:$true] %s507
        %510 = dma.hbm_to_vmem [thread:$0]  %s499, 16, %s508, %s106
        %s511 = sshll.u32 %s118, 4
        %512 = dma.done [#allocation3], %s511
        %s513 = sshll.u32 %s118, 4
        %514 = dma.done %s72, %s513
        %s515 = sshll.u32 %s118, 4
        %516 = dma.done %s89, %s515
        %s517 = sshll.u32 %s118, 4
        %518 = dma.done %s106, %s517
        %v519 = vld [vmem:[#allocation2] sm:$0xf]
        %v520 = vsel %vm128, %v519, 0.0
        %v521 = vrot.slane %v520, 4
        %v522 = vadd.f32 %v520, %v521
        %v523 = vrot.slane %v522, 2
        %v524 = vadd.f32 %v522, %v523
        %v525 = vrot.slane %v524, 1
        %v526 = vadd.f32 %v524, %v525
        %527 = vst [vmem:[%s51 + $0x5] sm:$0x1] %v526
        %s528 = sadd.s32 %s137, 6
        %s529 = smul.u32 %s528, 4
        %s530 = sld [smem:[#allocation5 + %s529]]
        %s531 = smul.addr %s530, 16
        %s532 = scalar_lea.hbm %s1, %s531
        // Predicated region
        $region109: #{tpu_custom_call.1} parent=11 // pred_check
          _
        $region110: #{tpu_custom_call.1} parent=11 // pred_check_branch
          %534 = sbr.rel target = $region112
        $region111: #{tpu_custom_call.1} parent=11 // pred_region
          %535 = sst [smem:[#allocation10]] [#allocation59]
          %536 = sst [smem:[#allocation11]] [#allocation58]
        $region112: #{tpu_custom_call.1} parent=11 // pred_fallthru
          _
        %538 = shalt.err (0)
        %s540 = sshll.u32 [#allocation2], 4
        %s541 = int_to_ptr.vmem [resolvable:$true] %s540
        %543 = dma.hbm_to_vmem [thread:$0]  %s532, 16, %s541, [#allocation3]
        %s544 = sadd.s32 %s529, 1
        %s545 = sld [smem:[#allocation5 + %s544]]
        %s546 = smul.addr %s545, 16
        %s547 = scalar_lea.hbm %s1, %s546
        // Predicated region
        $region113: #{tpu_custom_call.1} parent=11 // pred_check
          _
        $region114: #{tpu_custom_call.1} parent=11 // pred_check_branch
          %549 = sbr.rel target = $region116
        $region115: #{tpu_custom_call.1} parent=11 // pred_region
          %550 = sst [smem:[#allocation10]] [#allocation61]
          %551 = sst [smem:[#allocation11]] [#allocation60]
        $region116: #{tpu_custom_call.1} parent=11 // pred_fallthru
          _
        %553 = shalt.err (0)
        %s555 = sshll.u32 %s71, 4
        %s556 = int_to_ptr.vmem [resolvable:$true] %s555
        %558 = dma.hbm_to_vmem [thread:$0]  %s547, 16, %s556, %s72
        %s559 = sadd.s32 %s529, 2
        %s560 = sld [smem:[#allocation5 + %s559]]
        %s561 = smul.addr %s560, 16
        %s562 = scalar_lea.hbm %s1, %s561
        // Predicated region
        $region117: #{tpu_custom_call.1} parent=11 // pred_check
          _
        $region118: #{tpu_custom_call.1} parent=11 // pred_check_branch
          %564 = sbr.rel target = $region120
        $region119: #{tpu_custom_call.1} parent=11 // pred_region
          %565 = sst [smem:[#allocation10]] [#allocation63]
          %566 = sst [smem:[#allocation11]] [#allocation62]
        $region120: #{tpu_custom_call.1} parent=11 // pred_fallthru
          _
        %568 = shalt.err (0)
        %s570 = sshll.u32 %s88, 4
        %s571 = int_to_ptr.vmem [resolvable:$true] %s570
        %573 = dma.hbm_to_vmem [thread:$0]  %s562, 16, %s571, %s89
        %s574 = sadd.s32 %s529, 3
        %s575 = sld [smem:[#allocation5 + %s574]]
        %s576 = smul.addr %s575, 16
        %s577 = scalar_lea.hbm %s1, %s576
        // Predicated region
        $region121: #{tpu_custom_call.1} parent=11 // pred_check
          _
        $region122: #{tpu_custom_call.1} parent=11 // pred_check_branch
          %579 = sbr.rel target = $region124
        $region123: #{tpu_custom_call.1} parent=11 // pred_region
          %580 = sst [smem:[#allocation10]] [#allocation65]
          %581 = sst [smem:[#allocation11]] [#allocation64]
        $region124: #{tpu_custom_call.1} parent=11 // pred_fallthru
          _
        %583 = shalt.err (0)
        %s585 = sshll.u32 %s105, 4
        %s586 = int_to_ptr.vmem [resolvable:$true] %s585
        %588 = dma.hbm_to_vmem [thread:$0]  %s577, 16, %s586, %s106
        %s589 = sshll.u32 %s118, 4
        %590 = dma.done [#allocation3], %s589
        %s591 = sshll.u32 %s118, 4
        %592 = dma.done %s72, %s591
        %s593 = sshll.u32 %s118, 4
        %594 = dma.done %s89, %s593
        %s595 = sshll.u32 %s118, 4
        %596 = dma.done %s106, %s595
        %v597 = vld [vmem:[#allocation2] sm:$0xf]
        %v598 = vsel %vm128, %v597, 0.0
        %v599 = vrot.slane %v598, 4
        %v600 = vadd.f32 %v598, %v599
        %v601 = vrot.slane %v600, 2
        %v602 = vadd.f32 %v600, %v601
        %v603 = vrot.slane %v602, 1
        %v604 = vadd.f32 %v602, %v603
        %605 = vst [vmem:[%s51 + $0x6] sm:$0x1] %v604
        %s606 = sadd.s32 %s137, 7
        %s607 = smul.u32 %s606, 4
        %s608 = sld [smem:[#allocation5 + %s607]]
        %s609 = smul.addr %s608, 16
        %s610 = scalar_lea.hbm %s1, %s609
        // Predicated region
        $region125: #{tpu_custom_call.1} parent=11 // pred_check
          _
        $region126: #{tpu_custom_call.1} parent=11 // pred_check_branch
          %612 = sbr.rel target = $region128
        $region127: #{tpu_custom_call.1} parent=11 // pred_region
          %613 = sst [smem:[#allocation10]] [#allocation67]
          %614 = sst [smem:[#allocation11]] [#allocation66]
        $region128: #{tpu_custom_call.1} parent=11 // pred_fallthru
          _
        %616 = shalt.err (0)
        %s618 = sshll.u32 [#allocation2], 4
        %s619 = int_to_ptr.vmem [resolvable:$true] %s618
        %621 = dma.hbm_to_vmem [thread:$0]  %s610, 16, %s619, [#allocation3]
        %s622 = sadd.s32 %s607, 1
        %s623 = sld [smem:[#allocation5 + %s622]]
        %s624 = smul.addr %s623, 16
        %s625 = scalar_lea.hbm %s1, %s624
        // Predicated region
        $region129: #{tpu_custom_call.1} parent=11 // pred_check
          _
        $region130: #{tpu_custom_call.1} parent=11 // pred_check_branch
          %627 = sbr.rel target = $region132
        $region131: #{tpu_custom_call.1} parent=11 // pred_region
          %628 = sst [smem:[#allocation10]] [#allocation69]
          %629 = sst [smem:[#allocation11]] [#allocation68]
        $region132: #{tpu_custom_call.1} parent=11 // pred_fallthru
          _
        %631 = shalt.err (0)
        %s633 = sshll.u32 %s71, 4
        %s634 = int_to_ptr.vmem [resolvable:$true] %s633
        %636 = dma.hbm_to_vmem [thread:$0]  %s625, 16, %s634, %s72
        %s637 = sadd.s32 %s607, 2
        %s638 = sld [smem:[#allocation5 + %s637]]
        %s639 = smul.addr %s638, 16
        %s640 = scalar_lea.hbm %s1, %s639
        // Predicated region
        $region133: #{tpu_custom_call.1} parent=11 // pred_check
          _
        $region134: #{tpu_custom_call.1} parent=11 // pred_check_branch
          %642 = sbr.rel target = $region136
        $region135: #{tpu_custom_call.1} parent=11 // pred_region
          %643 = sst [smem:[#allocation10]] [#allocation71]
          %644 = sst [smem:[#allocation11]] [#allocation70]
        $region136: #{tpu_custom_call.1} parent=11 // pred_fallthru
          _
        %646 = shalt.err (0)
        %s648 = sshll.u32 %s88, 4
        %s649 = int_to_ptr.vmem [resolvable:$true] %s648
        %651 = dma.hbm_to_vmem [thread:$0]  %s640, 16, %s649, %s89
        %s652 = sadd.s32 %s607, 3
        %s653 = sld [smem:[#allocation5 + %s652]]
        %s654 = smul.addr %s653, 16
        %s655 = scalar_lea.hbm %s1, %s654
        // Predicated region
        $region137: #{tpu_custom_call.1} parent=11 // pred_check
          _
        $region138: #{tpu_custom_call.1} parent=11 // pred_check_branch
          %657 = sbr.rel target = $region140
        $region139: #{tpu_custom_call.1} parent=11 // pred_region
          %658 = sst [smem:[#allocation10]] [#allocation73]
          %659 = sst [smem:[#allocation11]] [#allocation72]
        $region140: #{tpu_custom_call.1} parent=11 // pred_fallthru
          _
        %661 = shalt.err (0)
        %s663 = sshll.u32 %s105, 4
        %s664 = int_to_ptr.vmem [resolvable:$true] %s663
        %666 = dma.hbm_to_vmem [thread:$0]  %s655, 16, %s664, %s106
        %s667 = sshll.u32 %s118, 4
        %668 = dma.done [#allocation3], %s667
        %s669 = sshll.u32 %s118, 4
        %670 = dma.done %s72, %s669
        %s671 = sshll.u32 %s118, 4
        %672 = dma.done %s89, %s671
        %s673 = sshll.u32 %s118, 4
        %674 = dma.done %s106, %s673
        %v675 = vld [vmem:[#allocation2] sm:$0xf]
        %v676 = vsel %vm128, %v675, 0.0
        %v677 = vrot.slane %v676, 4
        %v678 = vadd.f32 %v676, %v677
        %v679 = vrot.slane %v678, 2
        %v680 = vadd.f32 %v678, %v679
        %v681 = vrot.slane %v680, 1
        %v682 = vadd.f32 %v680, %v681
        %683 = vst [vmem:[%s51 + $0x7] sm:$0x1] %v682
        %s684 = sand.u32 %s24, 1
        %s685 = scalar_lea.sflag [#allocation7], %s684
        %s686 = sand.u32 %s24, 1
        %s687 = smul.addr %s686, 8
        %s688 = scalar_lea.vmem [#allocation6], %s687
        // Predicated region
        $region141: #{tpu_custom_call.1} parent=11 // pred_check
          %p689 = pneg %p30
        $region142: #{tpu_custom_call.1} parent=11 // pred_check_branch
          %691 = sbr.rel (%p689) target = $region144
        $region143: #{tpu_custom_call.1} parent=11 // pred_region
          %s693 = ssub.s32 128, 128
          %694 = vsyncadd %s685, %s693
          %s695 = smul.addr %s15, 128
          %s696 = scalar_lea.hbm %s2, %s695
          %s698 = sshll.u32 %s688, 4
          %s699 = int_to_ptr.vmem [resolvable:$true] %s698
          %701 = dma.vmem_to_hbm [thread:$0]  %s699, 128, %s696, %s685
        $region144: #{tpu_custom_call.1} parent=11 // pred_fallthru
          _
      $region12: #{tpu_custom_call.1} parent=5 // pred_fallthru
        _
      %p702 = scmp.le.s32.totalorder 1, %s15
      // Predicated region
      $region145: #{tpu_custom_call.1} parent=5 // pred_check
        %p703 = pneg %p702
      $region146: #{tpu_custom_call.1} parent=5 // pred_check_branch
        %705 = sbr.rel (%p703) target = $region148
      $region147: #{tpu_custom_call.1} parent=5 // pred_region
        %s706 = ssub.s32 %s15, 1
        // Predicated region
        $region149: #{tpu_custom_call.1} parent=147 // pred_check
          %p707 = pneg %p36
        $region150: #{tpu_custom_call.1} parent=147 // pred_check_branch
          %709 = sbr.rel (%p707) target = $region152
        $region151: #{tpu_custom_call.1} parent=147 // pred_region
          %s710 = sand.u32 %s27, 1
          %s711 = scalar_lea.sflag [#allocation7], %s710
          %s712 = sand.u32 %s27, 1
          %s713 = smul.addr %s712, 8
          %s714 = scalar_lea.vmem [#allocation6], %s713
          %715 = dma.done %s711, 128
        $region152: #{tpu_custom_call.1} parent=147 // pred_fallthru
          _
      $region148: #{tpu_custom_call.1} parent=5 // pred_fallthru
        _
    $region6: #{tpu_custom_call.1} parent=1 // loop_footer
      %s19 = sadd.s32 1, %s15
    $region7: #{tpu_custom_call.1} parent=1 // loop_footer_branch
      %14 = sbr.rel target = $region3
    $region8: #{tpu_custom_call.1} parent=1 // loop_exit
      _
    %716 = vsyncpa [#allocation7], 1
    %s717 = scalar_lea.sflag [#allocation7], 1
    %718 = vsyncpa %s717, 1
  %719 = vsyncmov [#allocation3]
  %s720 = vpop.sfrf %719
  %p721 = scmp.eq.s32.totalorder %s720, 0
  %p722 = pneg %p721
  %724 = shalt.err (%p722)
  %s725 = scalar_lea.sflag [#allocation3], 1
  %726 = vsyncmov %s725
  %s727 = vpop.sfrf %726
  %p728 = scmp.eq.s32.totalorder %s727, 0
  %p729 = pneg %p728
  %731 = shalt.err (%p729)
  %s732 = scalar_lea.sflag [#allocation3], 2
  %733 = vsyncmov %s732
  %s734 = vpop.sfrf %733
  %p735 = scmp.eq.s32.totalorder %s734, 0
  %p736 = pneg %p735
  %738 = shalt.err (%p736)
  %s739 = scalar_lea.sflag [#allocation3], 3
  %740 = vsyncmov %s739
  %s741 = vpop.sfrf %740
  %p742 = scmp.eq.s32.totalorder %s741, 0
  %p743 = pneg %p742
  %745 = shalt.err (%p743)

</llo_original>
